<compile_context>
chip_gen: v5e
topology: v5e:2x2
jax: 0.10.0
libtpu: 0.0.40
codegen_flags: <defaults>
</compile_context>

<pallas_src>
import functools

import jax
import jax.numpy as jnp
import numpy as np
from jax.experimental import pallas as pl
from jax.experimental.pallas import tpu as pltpu

_MASK_VALUE = -1e30  # finite "-inf": exp() underflows to 0, never yields NaN.


def _mha_kernel(q_ref, k_ref, v_ref, mask_ref,
                wq_ref, bq_ref, wk_ref, bk_ref, wv_ref, bv_ref,
                wf_ref, bf_ref,
                out_ref, attn_ref,
                *, num_head: int, d_k: int, compute_dtype):
    f32 = jnp.float32
    cdt = compute_dtype

    q = q_ref[0].astype(cdt)     # (Tq, d_model)
    k = k_ref[0].astype(cdt)     # (Tk, d_model)
    v = v_ref[0].astype(cdt)     # (Tk, d_model)

    tq, dm = q.shape
    tk = k.shape[0]
    h = num_head

    # Broadcast activations over the head axis so every matmul is a clean
    # head-batched dot_general with the batch dim leading on both operands
    # (natural (h, rows, cols) output order => no hidden transposes).
    qb = jnp.broadcast_to(q[None], (h, tq, dm))
    kb = jnp.broadcast_to(k[None], (h, tk, dm))
    vb = jnp.broadcast_to(v[None], (h, tk, dm))

    # Per-head linear projections: x @ W_h + b_h, f32 accumulation on the MXU.
    Q = jnp.einsum('hqm,hmd->hqd', qb, wq_ref[...],
                   preferred_element_type=f32) + bq_ref[...]      # (H, Tq, d_k)
    K = jnp.einsum('hkm,hmd->hkd', kb, wk_ref[...],
                   preferred_element_type=f32) + bk_ref[...]      # (H, Tk, d_k)
    V = jnp.einsum('hkm,hmd->hkd', vb, wv_ref[...],
                   preferred_element_type=f32) + bv_ref[...]      # (H, Tk, d_v)

    # Fold the 1/sqrt(d_k) scale into Q (smaller than the (H, Tq, Tk) scores).
    Q = Q * (1.0 / (d_k ** 0.5))

    # Scaled dot-product scores for all heads at once.
    s = jnp.einsum('hqd,hkd->hqk', Q.astype(cdt), K.astype(cdt),
                   preferred_element_type=f32)                    # (H, Tq, Tk)

    maski = jnp.broadcast_to(mask_ref[0].astype(jnp.int32)[None], s.shape)
    s = jnp.where(maski != 0, s, _MASK_VALUE)

    # Softmax over keys, in f32. (A fully-masked row yields a uniform row
    # instead of torch's NaN -- intentional.)
    m = jnp.max(s, axis=-1, keepdims=True)
    e = jnp.exp(s - m)
    p = e * pl.reciprocal(jnp.sum(e, axis=-1, keepdims=True), approx=True)

    # Second output: attention probabilities summed over heads.
    attn_ref[0] = jnp.sum(p, axis=0).astype(attn_ref.dtype)

    # Attention-weighted values, then the output projection folded per head:
    #   concat_h(o_h) @ Wf.T + bf  ==  sum_h (o_h @ Wf_h) + bf
    o = jnp.einsum('hqk,hkd->hqd', p.astype(cdt), V.astype(cdt),
                   preferred_element_type=f32)                    # (H, Tq, d_v)
    out = jnp.einsum('hqd,hdm->hqm', o.astype(cdt), wf_ref[...],
                     preferred_element_type=f32)                  # (H, Tq, dm)
    out = jnp.sum(out, axis=0) + bf_ref[...]                      # (Tq, dm)
    out_ref[0] = out.astype(out_ref.dtype)


def multihead_attention(q, k, v, mask, params, *, num_head, d_k, d_v,
                        compute_dtype=jnp.bfloat16):
    """Pallas MultiHeadAttention forward (eval mode: dropout is identity).

    Returns (out, attention summed over heads), like the PyTorch module.
    """
    B, Tq, d_model = q.shape
    Tk = k.shape[1]
    H = num_head
    wq, bq, wk, bk, wv, bv, wf, bf = params

    # Host-side prep (once, outside the hot loop):
    #  - torch Linear stores W as (out, in); split per head and transpose to
    #    (H, in, head_dim) so the kernel does x @ W_h with no on-chip .T,
    #  - cast matmul operands to the MXU compute dtype (bf16 by default),
    #  - keep biases f32 (added after f32 accumulation).
    wq_h = wq.reshape(H, d_k, d_model).transpose(0, 2, 1).astype(compute_dtype)
    wk_h = wk.reshape(H, d_k, d_model).transpose(0, 2, 1).astype(compute_dtype)
    wv_h = wv.reshape(H, d_v, d_model).transpose(0, 2, 1).astype(compute_dtype)
    wf_h = wf.T.reshape(H, d_v, d_model).astype(compute_dtype)

    bq_h = bq.reshape(H, 1, d_k).astype(jnp.float32)
    bk_h = bk.reshape(H, 1, d_k).astype(jnp.float32)
    bv_h = bv.reshape(H, 1, d_v).astype(jnp.float32)
    bf2 = bf.reshape(1, d_model).astype(jnp.float32)

    mask8 = mask.astype(jnp.int8)   # 4x less mask HBM traffic than int32

    kernel = functools.partial(_mha_kernel, num_head=H, d_k=d_k,
                               compute_dtype=compute_dtype)

    full = lambda shape: pl.BlockSpec(shape, lambda b: (0,) * len(shape))

    grid_spec = pltpu.PrefetchScalarGridSpec(
        num_scalar_prefetch=0,
        grid=(B,),
        in_specs=[
            pl.BlockSpec((1, Tq, d_model), lambda b: (b, 0, 0)),   # q
            pl.BlockSpec((1, Tk, d_model), lambda b: (b, 0, 0)),   # k
            pl.BlockSpec((1, Tk, d_model), lambda b: (b, 0, 0)),   # v
            pl.BlockSpec((1, Tq, Tk), lambda b: (b, 0, 0)),        # mask (int8)
            full(wq_h.shape), full(bq_h.shape),
            full(wk_h.shape), full(bk_h.shape),
            full(wv_h.shape), full(bv_h.shape),
            full(wf_h.shape), full(bf2.shape),
        ],
        out_specs=[
            pl.BlockSpec((1, Tq, d_model), lambda b: (b, 0, 0)),   # out
            pl.BlockSpec((1, Tq, Tk), lambda b: (b, 0, 0)),        # head-summed attn
        ],
    )

    out_shapes = (
        jax.ShapeDtypeStruct((B, Tq, d_model), q.dtype),
        jax.ShapeDtypeStruct((B, Tq, Tk), jnp.float32),
    )

    fn = pl.pallas_call(
        kernel,
        grid_spec=grid_spec,
        out_shape=out_shapes,
        compiler_params=pltpu.CompilerParams(
            dimension_semantics=("parallel",)),
    )
    return fn(q, k, v, mask8, wq_h, bq_h, wk_h, bk_h, wv_h, bv_h, wf_h, bf2)


def _init_linear(key, out_features, in_features):
    """Deterministic torch-like Linear init: U(-1/sqrt(fan_in), 1/sqrt(fan_in))."""
    kw, kb = jax.random.split(key)
    bound = 1.0 / np.sqrt(in_features)
    w = jax.random.uniform(kw, (out_features, in_features), jnp.float32, -bound, bound)
    b = jax.random.uniform(kb, (out_features,), jnp.float32, -bound, bound)
    return w, b


def _reference(q, k, v, mask, params, num_head, d_k, d_v):
    """Pure-JAX f32 reference mirroring the PyTorch forward (eval mode)."""
    wq, bq, wk, bk, wv, bv, wf, bf = params
    B, Tq, D = q.shape

    def split_heads(x):
        # torch.stack(torch.split(x, dh, dim=-1), dim=1) -> (B, H, T, dh)
        return jnp.stack(jnp.split(x, num_head, axis=-1), axis=1)

    Q = split_heads(q @ wq.T + bq)
    K = split_heads(k @ wk.T + bk)
    V = split_heads(v @ wv.T + bv)

    s = jnp.einsum('bhqd,bhkd->bhqk', Q, K) / (d_k ** 0.5)
    s = jnp.where(mask[:, None, :, :] != 0, s, -jnp.inf)
    p = jax.nn.softmax(s, axis=-1)
    o = jnp.einsum('bhqk,bhkd->bhqd', p, V)           # (B, H, Tq, d_v)
    o = jnp.transpose(o, (0, 2, 1, 3)).reshape(B, Tq, num_head * d_v)
    out = o @ wf.T + bf
    return out, p.sum(axis=1)


if __name__ == "__main__":
    # Small, deterministic configuration.
    B, Tq, Tk = 2, 8, 8
    d_model, num_head = 32, 4
    d_k = d_model // num_head
    d_v = d_model // num_head

    key = jax.random.PRNGKey(0)
    kq, kk, kv, kwq, kwk, kwv, kwf, kmask = jax.random.split(key, 8)

    q = jax.random.normal(kq, (B, Tq, d_model), jnp.float32)
    k = jax.random.normal(kk, (B, Tk, d_model), jnp.float32)
    v = jax.random.normal(kv, (B, Tk, d_model), jnp.float32)

    # Boolean-style mask (1 = attend, 0 = masked); guarantee every row has a
    # valid position so the f32 reference (-inf fill) never produces NaN rows.
    mask = (jax.random.uniform(kmask, (B, Tq, Tk)) > 0.2).astype(jnp.int32)
    mask = mask.at[:, :, 0].set(1)

    wq, bq = _init_linear(kwq, num_head * d_k, d_model)
    wk, bk = _init_linear(kwk, num_head * d_k, d_model)
    wv, bv = _init_linear(kwv, num_head * d_v, d_model)
    wf, bf = _init_linear(kwf, d_model, num_head * d_v)
    params = (wq, bq, wk, bk, wv, bv, wf, bf)

    out, attn = multihead_attention(q, k, v, mask, params,
                                    num_head=num_head, d_k=d_k, d_v=d_v)
    jax.block_until_ready((out, attn))

    out_ref, attn_ref = _reference(q, k, v, mask, params, num_head, d_k, d_v)
    # bf16 MXU operands (f32 accumulation) => compare against the f32
    # reference with bf16-level tolerances.
    np.testing.assert_allclose(np.asarray(out), np.asarray(out_ref),
                               rtol=3e-2, atol=3e-2)
    np.testing.assert_allclose(np.asarray(attn), np.asarray(attn_ref),
                               rtol=3e-2, atol=3e-2)

    print("KERNEL_OK")
</pallas_src>

<mosaic_0001>
module attributes {stable_mosaic.version = 11 : i64} {
  func.func @_mha_kernel(%arg0: i32, %arg1: memref<1x8x32xf32, #tpu.memory_space<vmem>>, %arg2: memref<1x8x32xf32, #tpu.memory_space<vmem>>, %arg3: memref<1x8x32xf32, #tpu.memory_space<vmem>>, %arg4: memref<1x8x8xi8, #tpu.memory_space<vmem>>, %arg5: memref<4x32x8xbf16, #tpu.memory_space<vmem>>, %arg6: memref<4x1x8xf32, #tpu.memory_space<vmem>>, %arg7: memref<4x32x8xbf16, #tpu.memory_space<vmem>>, %arg8: memref<4x1x8xf32, #tpu.memory_space<vmem>>, %arg9: memref<4x32x8xbf16, #tpu.memory_space<vmem>>, %arg10: memref<4x1x8xf32, #tpu.memory_space<vmem>>, %arg11: memref<4x8x32xbf16, #tpu.memory_space<vmem>>, %arg12: memref<1x32xf32, #tpu.memory_space<vmem>>, %arg13: memref<1x8x32xf32, #tpu.memory_space<vmem>>, %arg14: memref<1x8x8xf32, #tpu.memory_space<vmem>>) attributes {dimension_semantics = [#tpu.dimension_semantics<parallel>], iteration_bounds = array<i64: 2>, scalar_prefetch = 0 : i64, scratch_operands = 0 : i64, tpu.core_type = #tpu.core_type<tc>, window_params = [{transform_indices = @transform_0, window_bounds = array<i64: 1, 8, 32>}, {transform_indices = @transform_1, window_bounds = array<i64: 1, 8, 32>}, {transform_indices = @transform_2, window_bounds = array<i64: 1, 8, 32>}, {transform_indices = @transform_3, window_bounds = array<i64: 1, 8, 8>}, {pipeline_mode = #tpu.pipeline_mode<synchronous>, transform_indices = @transform_4, window_bounds = array<i64: 4, 32, 8>}, {pipeline_mode = #tpu.pipeline_mode<synchronous>, transform_indices = @transform_5, window_bounds = array<i64: 4, 1, 8>}, {pipeline_mode = #tpu.pipeline_mode<synchronous>, transform_indices = @transform_6, window_bounds = array<i64: 4, 32, 8>}, {pipeline_mode = #tpu.pipeline_mode<synchronous>, transform_indices = @transform_7, window_bounds = array<i64: 4, 1, 8>}, {pipeline_mode = #tpu.pipeline_mode<synchronous>, transform_indices = @transform_8, window_bounds = array<i64: 4, 32, 8>}, {pipeline_mode = #tpu.pipeline_mode<synchronous>, transform_indices = @transform_9, window_bounds = array<i64: 4, 1, 8>}, {pipeline_mode = #tpu.pipeline_mode<synchronous>, transform_indices = @transform_10, window_bounds = array<i64: 4, 8, 32>}, {pipeline_mode = #tpu.pipeline_mode<synchronous>, transform_indices = @transform_11, window_bounds = array<i64: 1, 32>}, {transform_indices = @transform_12, window_bounds = array<i64: 1, 8, 32>}, {transform_indices = @transform_13, window_bounds = array<i64: 1, 8, 8>}]} {
    %c0 = arith.constant 0 : index
    %c0_0 = arith.constant 0 : index
    %c0_1 = arith.constant 0 : index
    %0 = vector.load %arg1[%c0, %c0_0, %c0_1] : memref<1x8x32xf32, #tpu.memory_space<vmem>>, vector<1x8x32xf32>
    %1 = vector.shape_cast %0 : vector<1x8x32xf32> to vector<8x32xf32>
    %2 = arith.truncf %1 : vector<8x32xf32> to vector<8x32xbf16>
    %c0_2 = arith.constant 0 : index
    %c0_3 = arith.constant 0 : index
    %c0_4 = arith.constant 0 : index
    %3 = vector.load %arg2[%c0_2, %c0_3, %c0_4] : memref<1x8x32xf32, #tpu.memory_space<vmem>>, vector<1x8x32xf32>
    %4 = vector.shape_cast %3 : vector<1x8x32xf32> to vector<8x32xf32>
    %5 = arith.truncf %4 : vector<8x32xf32> to vector<8x32xbf16>
    %c0_5 = arith.constant 0 : index
    %c0_6 = arith.constant 0 : index
    %c0_7 = arith.constant 0 : index
    %6 = vector.load %arg3[%c0_5, %c0_6, %c0_7] : memref<1x8x32xf32, #tpu.memory_space<vmem>>, vector<1x8x32xf32>
    %7 = vector.shape_cast %6 : vector<1x8x32xf32> to vector<8x32xf32>
    %8 = arith.truncf %7 : vector<8x32xf32> to vector<8x32xbf16>
    %9 = vector.shape_cast %2 : vector<8x32xbf16> to vector<1x8x32xbf16>
    %10 = vector.shape_cast %9 : vector<1x8x32xbf16> to vector<1x8x32xbf16>
    %11 = vector.broadcast %10 : vector<1x8x32xbf16> to vector<4x8x32xbf16>
    %12 = vector.shape_cast %5 : vector<8x32xbf16> to vector<1x8x32xbf16>
    %13 = vector.shape_cast %12 : vector<1x8x32xbf16> to vector<1x8x32xbf16>
    %14 = vector.broadcast %13 : vector<1x8x32xbf16> to vector<4x8x32xbf16>
    %15 = vector.shape_cast %8 : vector<8x32xbf16> to vector<1x8x32xbf16>
    %16 = vector.shape_cast %15 : vector<1x8x32xbf16> to vector<1x8x32xbf16>
    %17 = vector.broadcast %16 : vector<1x8x32xbf16> to vector<4x8x32xbf16>
    %c0_8 = arith.constant 0 : index
    %c0_9 = arith.constant 0 : index
    %c0_10 = arith.constant 0 : index
    %18 = vector.load %arg5[%c0_8, %c0_9, %c0_10] : memref<4x32x8xbf16, #tpu.memory_space<vmem>>, vector<4x32x8xbf16>
    "tpu.trace_start"() <{level = 10 : i32, message = "hqm,hmd->hqd"}> : () -> ()
    %cst = arith.constant dense<0.000000e+00> : vector<4x8x8xf32>
    %19 = tpu.matmul %11, %18, %cst {dimension_numbers = #tpu.dot_dimension_numbers<[2], [1], [1], [2], [0, 0, 0, 1, 1, 2], [0], [0]>} : vector<4x8x32xbf16>, vector<4x32x8xbf16>, vector<4x8x8xf32> -> vector<4x8x8xf32>
    "tpu.trace_stop"() : () -> ()
    %c0_11 = arith.constant 0 : index
    %c0_12 = arith.constant 0 : index
    %c0_13 = arith.constant 0 : index
    %20 = vector.load %arg6[%c0_11, %c0_12, %c0_13] : memref<4x1x8xf32, #tpu.memory_space<vmem>>, vector<4x1x8xf32>
    %21 = vector.broadcast %20 : vector<4x1x8xf32> to vector<4x8x8xf32>
    %22 = arith.addf %19, %21 : vector<4x8x8xf32>
    %c0_14 = arith.constant 0 : index
    %c0_15 = arith.constant 0 : index
    %c0_16 = arith.constant 0 : index
    %23 = vector.load %arg7[%c0_14, %c0_15, %c0_16] : memref<4x32x8xbf16, #tpu.memory_space<vmem>>, vector<4x32x8xbf16>
    "tpu.trace_start"() <{level = 10 : i32, message = "hkm,hmd->hkd"}> : () -> ()
    %cst_17 = arith.constant dense<0.000000e+00> : vector<4x8x8xf32>
    %24 = tpu.matmul %14, %23, %cst_17 {dimension_numbers = #tpu.dot_dimension_numbers<[2], [1], [1], [2], [0, 0, 0, 1, 1, 2], [0], [0]>} : vector<4x8x32xbf16>, vector<4x32x8xbf16>, vector<4x8x8xf32> -> vector<4x8x8xf32>
    "tpu.trace_stop"() : () -> ()
    %c0_18 = arith.constant 0 : index
    %c0_19 = arith.constant 0 : index
    %c0_20 = arith.constant 0 : index
    %25 = vector.load %arg8[%c0_18, %c0_19, %c0_20] : memref<4x1x8xf32, #tpu.memory_space<vmem>>, vector<4x1x8xf32>
    %26 = vector.broadcast %25 : vector<4x1x8xf32> to vector<4x8x8xf32>
    %27 = arith.addf %24, %26 : vector<4x8x8xf32>
    %c0_21 = arith.constant 0 : index
    %c0_22 = arith.constant 0 : index
    %c0_23 = arith.constant 0 : index
    %28 = vector.load %arg9[%c0_21, %c0_22, %c0_23] : memref<4x32x8xbf16, #tpu.memory_space<vmem>>, vector<4x32x8xbf16>
    "tpu.trace_start"() <{level = 10 : i32, message = "hkm,hmd->hkd"}> : () -> ()
    %cst_24 = arith.constant dense<0.000000e+00> : vector<4x8x8xf32>
    %29 = tpu.matmul %17, %28, %cst_24 {dimension_numbers = #tpu.dot_dimension_numbers<[2], [1], [1], [2], [0, 0, 0, 1, 1, 2], [0], [0]>} : vector<4x8x32xbf16>, vector<4x32x8xbf16>, vector<4x8x8xf32> -> vector<4x8x8xf32>
    "tpu.trace_stop"() : () -> ()
    %c0_25 = arith.constant 0 : index
    %c0_26 = arith.constant 0 : index
    %c0_27 = arith.constant 0 : index
    %30 = vector.load %arg10[%c0_25, %c0_26, %c0_27] : memref<4x1x8xf32, #tpu.memory_space<vmem>>, vector<4x1x8xf32>
    %31 = vector.broadcast %30 : vector<4x1x8xf32> to vector<4x8x8xf32>
    %32 = arith.addf %29, %31 : vector<4x8x8xf32>
    %cst_28 = arith.constant 0.353553385 : f32
    %33 = vector.broadcast %cst_28 : f32 to vector<4x8x8xf32>
    %34 = arith.mulf %22, %33 : vector<4x8x8xf32>
    %35 = arith.truncf %34 : vector<4x8x8xf32> to vector<4x8x8xbf16>
    %36 = arith.truncf %27 : vector<4x8x8xf32> to vector<4x8x8xbf16>
    "tpu.trace_start"() <{level = 10 : i32, message = "hqd,hkd->hqk"}> : () -> ()
    %cst_29 = arith.constant dense<0.000000e+00> : vector<4x8x8xf32>
    %37 = tpu.matmul %35, %36, %cst_29 {dimension_numbers = #tpu.dot_dimension_numbers<[2], [2], [1], [1], [0, 0, 0, 1, 1, 1], [0], [0]>} : vector<4x8x8xbf16>, vector<4x8x8xbf16>, vector<4x8x8xf32> -> vector<4x8x8xf32>
    "tpu.trace_stop"() : () -> ()
    %c0_30 = arith.constant 0 : index
    %c0_31 = arith.constant 0 : index
    %c0_32 = arith.constant 0 : index
    %38 = vector.load %arg4[%c0_30, %c0_31, %c0_32] : memref<1x8x8xi8, #tpu.memory_space<vmem>>, vector<1x8x8xi8>
    %39 = vector.shape_cast %38 : vector<1x8x8xi8> to vector<8x8xi8>
    %40 = arith.extsi %39 : vector<8x8xi8> to vector<8x8xi32>
    %41 = vector.shape_cast %40 : vector<8x8xi32> to vector<1x8x8xi32>
    %42 = vector.shape_cast %41 : vector<1x8x8xi32> to vector<1x8x8xi32>
    %43 = vector.broadcast %42 : vector<1x8x8xi32> to vector<4x8x8xi32>
    %c0_i32 = arith.constant 0 : i32
    %44 = vector.broadcast %c0_i32 : i32 to vector<4x8x8xi32>
    %45 = arith.cmpi ne, %43, %44 : vector<4x8x8xi32>
    %cst_33 = arith.constant -1.000000e+30 : f32
    %46 = vector.broadcast %cst_33 : f32 to vector<4x8x8xf32>
    %47 = arith.select %45, %37, %46 : vector<4x8x8xi1>, vector<4x8x8xf32>
    %cst_34 = arith.constant dense<0xFF800000> : vector<4x8xf32>
    %48 = vector.multi_reduction <maximumf>, %47, %cst_34 [2] : vector<4x8x8xf32> to vector<4x8xf32>
    %49 = vector.shape_cast %48 : vector<4x8xf32> to vector<4x8x1xf32>
    %50 = vector.broadcast %49 : vector<4x8x1xf32> to vector<4x8x8xf32>
    %51 = arith.subf %47, %50 : vector<4x8x8xf32>
    %52 = math.exp %51 : vector<4x8x8xf32>
    %cst_35 = arith.constant dense<0.000000e+00> : vector<4x8xf32>
    %53 = vector.multi_reduction <add>, %52, %cst_35 [2] : vector<4x8x8xf32> to vector<4x8xf32>
    %54 = vector.shape_cast %53 : vector<4x8xf32> to vector<4x8x1xf32>
    %55 = tpu.reciprocal %54 {approx = true} : vector<4x8x1xf32> -> vector<4x8x1xf32>
    %56 = vector.broadcast %55 : vector<4x8x1xf32> to vector<4x8x8xf32>
    %57 = arith.mulf %52, %56 : vector<4x8x8xf32>
    %cst_36 = arith.constant dense<0.000000e+00> : vector<8x8xf32>
    %58 = vector.multi_reduction <add>, %57, %cst_36 [0] : vector<4x8x8xf32> to vector<8x8xf32>
    %c0_37 = arith.constant 0 : index
    %c0_38 = arith.constant 0 : index
    %c0_39 = arith.constant 0 : index
    %59 = vector.load %arg14[%c0_37, %c0_38, %c0_39] : memref<1x8x8xf32, #tpu.memory_space<vmem>>, vector<1x8x8xf32>
    %60 = vector.shape_cast %59 : vector<1x8x8xf32> to vector<8x8xf32>
    %61 = vector.shape_cast %58 : vector<8x8xf32> to vector<1x8x8xf32>
    tpu.vector_store %arg14[%c0_37, %c0_38, %c0_39], %61 {strides = array<i32>} : memref<1x8x8xf32, #tpu.memory_space<vmem>>, vector<1x8x8xf32>,
    %62 = arith.truncf %57 : vector<4x8x8xf32> to vector<4x8x8xbf16>
    %63 = arith.truncf %32 : vector<4x8x8xf32> to vector<4x8x8xbf16>
    "tpu.trace_start"() <{level = 10 : i32, message = "hqk,hkd->hqd"}> : () -> ()
    %cst_40 = arith.constant dense<0.000000e+00> : vector<4x8x8xf32>
    %64 = tpu.matmul %62, %63, %cst_40 {dimension_numbers = #tpu.dot_dimension_numbers<[2], [1], [1], [2], [0, 0, 0, 1, 1, 2], [0], [0]>} : vector<4x8x8xbf16>, vector<4x8x8xbf16>, vector<4x8x8xf32> -> vector<4x8x8xf32>
    "tpu.trace_stop"() : () -> ()
    %65 = arith.truncf %64 : vector<4x8x8xf32> to vector<4x8x8xbf16>
    %c0_41 = arith.constant 0 : index
    %c0_42 = arith.constant 0 : index
    %c0_43 = arith.constant 0 : index
    %66 = vector.load %arg11[%c0_41, %c0_42, %c0_43] : memref<4x8x32xbf16, #tpu.memory_space<vmem>>, vector<4x8x32xbf16>
    "tpu.trace_start"() <{level = 10 : i32, message = "hqd,hdm->hqm"}> : () -> ()
    %cst_44 = arith.constant dense<0.000000e+00> : vector<4x8x32xf32>
    %67 = tpu.matmul %65, %66, %cst_44 {dimension_numbers = #tpu.dot_dimension_numbers<[2], [1], [1], [2], [0, 0, 0, 1, 1, 2], [0], [0]>} : vector<4x8x8xbf16>, vector<4x8x32xbf16>, vector<4x8x32xf32> -> vector<4x8x32xf32>
    "tpu.trace_stop"() : () -> ()
    %cst_45 = arith.constant dense<0.000000e+00> : vector<8x32xf32>
    %68 = vector.multi_reduction <add>, %67, %cst_45 [0] : vector<4x8x32xf32> to vector<8x32xf32>
    %c0_46 = arith.constant 0 : index
    %c0_47 = arith.constant 0 : index
    %69 = vector.load %arg12[%c0_46, %c0_47] : memref<1x32xf32, #tpu.memory_space<vmem>>, vector<1x32xf32>
    %70 = vector.broadcast %69 : vector<1x32xf32> to vector<8x32xf32>
    %71 = arith.addf %68, %70 : vector<8x32xf32>
    %c0_48 = arith.constant 0 : index
    %c0_49 = arith.constant 0 : index
    %c0_50 = arith.constant 0 : index
    %72 = vector.load %arg13[%c0_48, %c0_49, %c0_50] : memref<1x8x32xf32, #tpu.memory_space<vmem>>, vector<1x8x32xf32>
    %73 = vector.shape_cast %72 : vector<1x8x32xf32> to vector<8x32xf32>
    %74 = vector.shape_cast %71 : vector<8x32xf32> to vector<1x8x32xf32>
    tpu.vector_store %arg13[%c0_48, %c0_49, %c0_50], %74 {strides = array<i32>} : memref<1x8x32xf32, #tpu.memory_space<vmem>>, vector<1x8x32xf32>,
    return
  }
  func.func @transform_0(%arg0: i32) -> (i32, i32, i32) {
    %c0_i32 = arith.constant 0 : i32
    %c0_i32_0 = arith.constant 0 : i32
    %c0_i32_1 = arith.constant 0 : i32
    return %arg0, %c0_i32, %c0_i32_0 : i32, i32, i32
  }
  func.func @transform_1(%arg0: i32) -> (i32, i32, i32) {
    %c0_i32 = arith.constant 0 : i32
    %c0_i32_0 = arith.constant 0 : i32
    %c0_i32_1 = arith.constant 0 : i32
    return %arg0, %c0_i32, %c0_i32_0 : i32, i32, i32
  }
  func.func @transform_2(%arg0: i32) -> (i32, i32, i32) {
    %c0_i32 = arith.constant 0 : i32
    %c0_i32_0 = arith.constant 0 : i32
    %c0_i32_1 = arith.constant 0 : i32
    return %arg0, %c0_i32, %c0_i32_0 : i32, i32, i32
  }
  func.func @transform_3(%arg0: i32) -> (i32, i32, i32) {
    %c0_i32 = arith.constant 0 : i32
    %c0_i32_0 = arith.constant 0 : i32
    %c0_i32_1 = arith.constant 0 : i32
    return %arg0, %c0_i32, %c0_i32_0 : i32, i32, i32
  }
  func.func @transform_4(%arg0: i32) -> (i32, i32, i32) {
    %c0_i32 = arith.constant 0 : i32
    %c0_i32_0 = arith.constant 0 : i32
    %c0_i32_1 = arith.constant 0 : i32
    %c0_i32_2 = arith.constant 0 : i32
    return %c0_i32, %c0_i32_0, %c0_i32_1 : i32, i32, i32
  }
  func.func @transform_5(%arg0: i32) -> (i32, i32, i32) {
    %c0_i32 = arith.constant 0 : i32
    %c0_i32_0 = arith.constant 0 : i32
    %c0_i32_1 = arith.constant 0 : i32
    %c0_i32_2 = arith.constant 0 : i32
    return %c0_i32, %c0_i32_0, %c0_i32_1 : i32, i32, i32
  }
  func.func @transform_6(%arg0: i32) -> (i32, i32, i32) {
    %c0_i32 = arith.constant 0 : i32
    %c0_i32_0 = arith.constant 0 : i32
    %c0_i32_1 = arith.constant 0 : i32
    %c0_i32_2 = arith.constant 0 : i32
    return %c0_i32, %c0_i32_0, %c0_i32_1 : i32, i32, i32
  }
  func.func @transform_7(%arg0: i32) -> (i32, i32, i32) {
    %c0_i32 = arith.constant 0 : i32
    %c0_i32_0 = arith.constant 0 : i32
    %c0_i32_1 = arith.constant 0 : i32
    %c0_i32_2 = arith.constant 0 : i32
    return %c0_i32, %c0_i32_0, %c0_i32_1 : i32, i32, i32
  }
  func.func @transform_8(%arg0: i32) -> (i32, i32, i32) {
    %c0_i32 = arith.constant 0 : i32
    %c0_i32_0 = arith.constant 0 : i32
    %c0_i32_1 = arith.constant 0 : i32
    %c0_i32_2 = arith.constant 0 : i32
    return %c0_i32, %c0_i32_0, %c0_i32_1 : i32, i32, i32
  }
  func.func @transform_9(%arg0: i32) -> (i32, i32, i32) {
    %c0_i32 = arith.constant 0 : i32
    %c0_i32_0 = arith.constant 0 : i32
    %c0_i32_1 = arith.constant 0 : i32
    %c0_i32_2 = arith.constant 0 : i32
    return %c0_i32, %c0_i32_0, %c0_i32_1 : i32, i32, i32
  }
  func.func @transform_10(%arg0: i32) -> (i32, i32, i32) {
    %c0_i32 = arith.constant 0 : i32
    %c0_i32_0 = arith.constant 0 : i32
    %c0_i32_1 = arith.constant 0 : i32
    %c0_i32_2 = arith.constant 0 : i32
    return %c0_i32, %c0_i32_0, %c0_i32_1 : i32, i32, i32
  }
  func.func @transform_11(%arg0: i32) -> (i32, i32) {
    %c0_i32 = arith.constant 0 : i32
    %c0_i32_0 = arith.constant 0 : i32
    %c0_i32_1 = arith.constant 0 : i32
    return %c0_i32, %c0_i32_0 : i32, i32
  }
  func.func @transform_12(%arg0: i32) -> (i32, i32, i32) {
    %c0_i32 = arith.constant 0 : i32
    %c0_i32_0 = arith.constant 0 : i32
    %c0_i32_1 = arith.constant 0 : i32
    return %arg0, %c0_i32, %c0_i32_0 : i32, i32, i32
  }
  func.func @transform_13(%arg0: i32) -> (i32, i32, i32) {
    %c0_i32 = arith.constant 0 : i32
    %c0_i32_0 = arith.constant 0 : i32
    %c0_i32_1 = arith.constant 0 : i32
    return %arg0, %c0_i32, %c0_i32_0 : i32, i32, i32
  }
}

</mosaic_0001>

<llo_original>
// kernel: tpu_custom_call.1
$region0: #{tpu_custom_call.1}
  #allocation0 [shape = 'u32[]', space=smem, size = 0x4, offset = 0x4, fixed_abs, tag = 'smem constant byte address 0x4 - core index']
  #allocation1 [shape = 'u32[72,128]{1,0:T(1,128)}', space=vmem, size = 0x9000, scoped, tag = 'internal scratch']
  %s0 = inlined_call_operand.vmem [shape: f32[2,8,32], index: 0, kind: input, shape index: {}]
  %s1 = inlined_call_operand.vmem [shape: f32[2,8,32], index: 1, kind: input, shape index: {}]
  %s2 = inlined_call_operand.vmem [shape: f32[2,8,32], index: 2, kind: input, shape index: {}]
  %s3 = inlined_call_operand.vmem [shape: s8[2,8,8], index: 3, kind: input, shape index: {}]
  %s4 = inlined_call_operand.vmem [shape: bf16[4,32,8], index: 4, kind: input, shape index: {}]
  %s5 = inlined_call_operand.vmem [shape: f32[4,1,8], index: 5, kind: input, shape index: {}]
  %s6 = inlined_call_operand.vmem [shape: bf16[4,32,8], index: 6, kind: input, shape index: {}]
  %s7 = inlined_call_operand.vmem [shape: f32[4,1,8], index: 7, kind: input, shape index: {}]
  %s8 = inlined_call_operand.vmem [shape: bf16[4,32,8], index: 8, kind: input, shape index: {}]
  %s9 = inlined_call_operand.vmem [shape: f32[4,1,8], index: 9, kind: input, shape index: {}]
  %s10 = inlined_call_operand.vmem [shape: bf16[4,8,32], index: 10, kind: input, shape index: {}]
  %s11 = inlined_call_operand.vmem [shape: f32[1,32], index: 11, kind: input, shape index: {}]
  %s12 = inlined_call_operand.hbm [shape: f32[2,8,32], index: 12, kind: output, shape index: {0}]
  %s13 = inlined_call_operand.hbm [shape: f32[2,8,8], index: 13, kind: output, shape index: {1}]
  %14 = xla_tuple %s12, %s13
  %s15 = sld [smem:[#allocation0]]
  $region89: #{tpu_custom_call.1} parent=0
    _
  %s17 = ssub.s32 1, %s15
  %s18 = scalar_select 0, %s17, %s15
  $region1: #{tpu_custom_call.1} parent=0
    #allocation2 [shape = 'u8[8192]{0}', space=vmem, size = 0x2000, scoped, tag = 'output window, operand 0']
    #allocation3 [shape = 's32[2]{0}', space=sflag, size = 0x8, scoped, tag = 'scoped memory for tpu_custom_call.1']
    #allocation4 [shape = 'u8[8192]{0}', space=vmem, size = 0x2000, scoped, tag = 'output window, operand 1']
    #allocation5 [shape = 's32[2]{0}', space=sflag, size = 0x8, scoped, tag = 'scoped memory for tpu_custom_call.1']
    %19 = vsyncpa [#allocation3], 0
    %s20 = scalar_lea.sflag [#allocation3], 1
    %21 = vsyncpa %s20, 0
    %22 = vsyncpa [#allocation5], 0
    %s23 = scalar_lea.sflag [#allocation5], 1
    %24 = vsyncpa %s23, 0
    loop: start=0, step=1, limit=4
    $region2: #{tpu_custom_call.1} parent=1 // loop_pre_header
      _
    $region3: #{tpu_custom_call.1} parent=1 // loop_header
      %s26 = sphi 0, %s30
      %p27 = scmp.ge.s32.totalorder %s26, 4
      %s36 = sphi 0, %s38
      %s39 = sphi 0, %s36
      %s40 = sphi 0, %s39
      %s56 = sphi 0, %s40
      %s62 = sphi 0, %s64
      %s65 = sphi 0, %s62
      %s66 = sphi 0, %s65
      %s82 = sphi 0, %s66
      %s88 = sphi 0, %s90
      %s91 = sphi 0, %s88
      %s92 = sphi 0, %s91
      %s108 = sphi 0, %s92
      %s114 = sphi 0, %s116
      %s117 = sphi 0, %s114
      %s118 = sphi 0, %s117
      %s134 = sphi 0, %s118
      %s138 = sphi 0, %s138
      %s140 = sphi 0, %s138
      %s141 = sphi 0, %s140
      %s155 = sphi 0, %s141
      %s159 = sphi 0, %s159
      %s161 = sphi 0, %s159
      %s162 = sphi 0, %s161
      %s176 = sphi 0, %s162
      %s180 = sphi 0, %s180
      %s182 = sphi 0, %s180
      %s183 = sphi 0, %s182
      %s197 = sphi 0, %s183
      %s201 = sphi 0, %s201
      %s203 = sphi 0, %s201
      %s204 = sphi 0, %s203
      %s218 = sphi 0, %s204
      %s222 = sphi 0, %s222
      %s224 = sphi 0, %s222
      %s225 = sphi 0, %s224
      %s239 = sphi 0, %s225
      %s243 = sphi 0, %s243
      %s245 = sphi 0, %s243
      %s246 = sphi 0, %s245
      %s260 = sphi 0, %s246
      %s264 = sphi 0, %s264
      %s266 = sphi 0, %s264
      %s267 = sphi 0, %s266
      %s281 = sphi 0, %s267
      %s285 = sphi 0, %s285
      %s287 = sphi 0, %s285
      %s288 = sphi 0, %s287
      %s302 = sphi 0, %s288
      %s308 = sphi 0, %s310
      %s311 = sphi 0, %s308
      %s312 = sphi 0, %s311
      %s328 = sphi 0, %s312
      %s334 = sphi 0, %s336
      %s337 = sphi 0, %s334
      %s338 = sphi 0, %s337
      %s354 = sphi 0, %s338
    $region4: #{tpu_custom_call.1} parent=1 // loop_header_branch
      %29 = sbr.rel (%p27) target = $region8
    $region5: #{tpu_custom_call.1} parent=1 // loop_body
      %s31 = ssub.s32 %s26, 1
      %s32 = ssub.s32 %s26, 2
      %s33 = sadd.s32 %s26, 1
      %s34 = ssub.s32 %s26, %s33
      %p35 = scmp.eq.s32.totalorder %s34, 0
      %s37 = sadd.s32 %s36, 1
      %s38 = scalar_select %p35, %s36, %s37
      %p41 = pneg %p35
      %p42 = scmp.eq.s32.totalorder %s26, 1
      %p43 = por %p41, %p42
      %p44 = scmp.ne.s32.totalorder %s36, %s39
      %p45 = scmp.eq.s32.totalorder %s26, 0
      %p46 = por %p44, %p45
      %p47 = scmp.ne.s32.totalorder %s36, %s39
      %p48 = scmp.eq.s32.totalorder %s31, 1
      %p49 = por %p47, %p48
      %p50 = scmp.ne.s32.totalorder %s39, %s40
      %p51 = scmp.eq.s32.totalorder %s31, 0
      %p52 = por %p50, %p51
      %p53 = scmp.ne.s32.totalorder %s39, %s40
      %p54 = scmp.eq.s32.totalorder %s32, 1
      %p55 = por %p53, %p54
      %p57 = scmp.ne.s32.totalorder %s40, %s56
      %p58 = scmp.eq.s32.totalorder %s32, 0
      %p59 = por %p57, %p58
      %s60 = ssub.s32 %s26, %s33
      %p61 = scmp.eq.s32.totalorder %s60, 0
      %s63 = sadd.s32 %s62, 1
      %s64 = scalar_select %p61, %s62, %s63
      %p67 = pneg %p61
      %p68 = scmp.eq.s32.totalorder %s26, 1
      %p69 = por %p67, %p68
      %p70 = scmp.ne.s32.totalorder %s62, %s65
      %p71 = scmp.eq.s32.totalorder %s26, 0
      %p72 = por %p70, %p71
      %p73 = scmp.ne.s32.totalorder %s62, %s65
      %p74 = scmp.eq.s32.totalorder %s31, 1
      %p75 = por %p73, %p74
      %p76 = scmp.ne.s32.totalorder %s65, %s66
      %p77 = scmp.eq.s32.totalorder %s31, 0
      %p78 = por %p76, %p77
      %p79 = scmp.ne.s32.totalorder %s65, %s66
      %p80 = scmp.eq.s32.totalorder %s32, 1
      %p81 = por %p79, %p80
      %p83 = scmp.ne.s32.totalorder %s66, %s82
      %p84 = scmp.eq.s32.totalorder %s32, 0
      %p85 = por %p83, %p84
      %s86 = ssub.s32 %s26, %s33
      %p87 = scmp.eq.s32.totalorder %s86, 0
      %s89 = sadd.s32 %s88, 1
      %s90 = scalar_select %p87, %s88, %s89
      %p93 = pneg %p87
      %p94 = scmp.eq.s32.totalorder %s26, 1
      %p95 = por %p93, %p94
      %p96 = scmp.ne.s32.totalorder %s88, %s91
      %p97 = scmp.eq.s32.totalorder %s26, 0
      %p98 = por %p96, %p97
      %p99 = scmp.ne.s32.totalorder %s88, %s91
      %p100 = scmp.eq.s32.totalorder %s31, 1
      %p101 = por %p99, %p100
      %p102 = scmp.ne.s32.totalorder %s91, %s92
      %p103 = scmp.eq.s32.totalorder %s31, 0
      %p104 = por %p102, %p103
      %p105 = scmp.ne.s32.totalorder %s91, %s92
      %p106 = scmp.eq.s32.totalorder %s32, 1
      %p107 = por %p105, %p106
      %p109 = scmp.ne.s32.totalorder %s92, %s108
      %p110 = scmp.eq.s32.totalorder %s32, 0
      %p111 = por %p109, %p110
      %s112 = ssub.s32 %s26, %s33
      %p113 = scmp.eq.s32.totalorder %s112, 0
      %s115 = sadd.s32 %s114, 1
      %s116 = scalar_select %p113, %s114, %s115
      %p119 = pneg %p113
      %p120 = scmp.eq.s32.totalorder %s26, 1
      %p121 = por %p119, %p120
      %p122 = scmp.ne.s32.totalorder %s114, %s117
      %p123 = scmp.eq.s32.totalorder %s26, 0
      %p124 = por %p122, %p123
      %p125 = scmp.ne.s32.totalorder %s114, %s117
      %p126 = scmp.eq.s32.totalorder %s31, 1
      %p127 = por %p125, %p126
      %p128 = scmp.ne.s32.totalorder %s117, %s118
      %p129 = scmp.eq.s32.totalorder %s31, 0
      %p130 = por %p128, %p129
      %p131 = scmp.ne.s32.totalorder %s117, %s118
      %p132 = scmp.eq.s32.totalorder %s32, 1
      %p133 = por %p131, %p132
      %p135 = scmp.ne.s32.totalorder %s118, %s134
      %p136 = scmp.eq.s32.totalorder %s32, 0
      %p137 = por %p135, %p136
      %s139 = sadd.s32 %s138, 1
      %p142 = scmp.eq.s32.totalorder %s26, 1
      %p143 = scmp.ne.s32.totalorder %s138, %s140
      %p144 = scmp.eq.s32.totalorder %s26, 0
      %p145 = por %p143, %p144
      %p146 = scmp.ne.s32.totalorder %s138, %s140
      %p147 = scmp.eq.s32.totalorder %s31, 1
      %p148 = por %p146, %p147
      %p149 = scmp.ne.s32.totalorder %s140, %s141
      %p150 = scmp.eq.s32.totalorder %s31, 0
      %p151 = por %p149, %p150
      %p152 = scmp.ne.s32.totalorder %s140, %s141
      %p153 = scmp.eq.s32.totalorder %s32, 1
      %p154 = por %p152, %p153
      %p156 = scmp.ne.s32.totalorder %s141, %s155
      %p157 = scmp.eq.s32.totalorder %s32, 0
      %p158 = por %p156, %p157
      %s160 = sadd.s32 %s159, 1
      %p163 = scmp.eq.s32.totalorder %s26, 1
      %p164 = scmp.ne.s32.totalorder %s159, %s161
      %p165 = scmp.eq.s32.totalorder %s26, 0
      %p166 = por %p164, %p165
      %p167 = scmp.ne.s32.totalorder %s159, %s161
      %p168 = scmp.eq.s32.totalorder %s31, 1
      %p169 = por %p167, %p168
      %p170 = scmp.ne.s32.totalorder %s161, %s162
      %p171 = scmp.eq.s32.totalorder %s31, 0
      %p172 = por %p170, %p171
      %p173 = scmp.ne.s32.totalorder %s161, %s162
      %p174 = scmp.eq.s32.totalorder %s32, 1
      %p175 = por %p173, %p174
      %p177 = scmp.ne.s32.totalorder %s162, %s176
      %p178 = scmp.eq.s32.totalorder %s32, 0
      %p179 = por %p177, %p178
      %s181 = sadd.s32 %s180, 1
      %p184 = scmp.eq.s32.totalorder %s26, 1
      %p185 = scmp.ne.s32.totalorder %s180, %s182
      %p186 = scmp.eq.s32.totalorder %s26, 0
      %p187 = por %p185, %p186
      %p188 = scmp.ne.s32.totalorder %s180, %s182
      %p189 = scmp.eq.s32.totalorder %s31, 1
      %p190 = por %p188, %p189
      %p191 = scmp.ne.s32.totalorder %s182, %s183
      %p192 = scmp.eq.s32.totalorder %s31, 0
      %p193 = por %p191, %p192
      %p194 = scmp.ne.s32.totalorder %s182, %s183
      %p195 = scmp.eq.s32.totalorder %s32, 1
      %p196 = por %p194, %p195
      %p198 = scmp.ne.s32.totalorder %s183, %s197
      %p199 = scmp.eq.s32.totalorder %s32, 0
      %p200 = por %p198, %p199
      %s202 = sadd.s32 %s201, 1
      %p205 = scmp.eq.s32.totalorder %s26, 1
      %p206 = scmp.ne.s32.totalorder %s201, %s203
      %p207 = scmp.eq.s32.totalorder %s26, 0
      %p208 = por %p206, %p207
      %p209 = scmp.ne.s32.totalorder %s201, %s203
      %p210 = scmp.eq.s32.totalorder %s31, 1
      %p211 = por %p209, %p210
      %p212 = scmp.ne.s32.totalorder %s203, %s204
      %p213 = scmp.eq.s32.totalorder %s31, 0
      %p214 = por %p212, %p213
      %p215 = scmp.ne.s32.totalorder %s203, %s204
      %p216 = scmp.eq.s32.totalorder %s32, 1
      %p217 = por %p215, %p216
      %p219 = scmp.ne.s32.totalorder %s204, %s218
      %p220 = scmp.eq.s32.totalorder %s32, 0
      %p221 = por %p219, %p220
      %s223 = sadd.s32 %s222, 1
      %p226 = scmp.eq.s32.totalorder %s26, 1
      %p227 = scmp.ne.s32.totalorder %s222, %s224
      %p228 = scmp.eq.s32.totalorder %s26, 0
      %p229 = por %p227, %p228
      %p230 = scmp.ne.s32.totalorder %s222, %s224
      %p231 = scmp.eq.s32.totalorder %s31, 1
      %p232 = por %p230, %p231
      %p233 = scmp.ne.s32.totalorder %s224, %s225
      %p234 = scmp.eq.s32.totalorder %s31, 0
      %p235 = por %p233, %p234
      %p236 = scmp.ne.s32.totalorder %s224, %s225
      %p237 = scmp.eq.s32.totalorder %s32, 1
      %p238 = por %p236, %p237
      %p240 = scmp.ne.s32.totalorder %s225, %s239
      %p241 = scmp.eq.s32.totalorder %s32, 0
      %p242 = por %p240, %p241
      %s244 = sadd.s32 %s243, 1
      %p247 = scmp.eq.s32.totalorder %s26, 1
      %p248 = scmp.ne.s32.totalorder %s243, %s245
      %p249 = scmp.eq.s32.totalorder %s26, 0
      %p250 = por %p248, %p249
      %p251 = scmp.ne.s32.totalorder %s243, %s245
      %p252 = scmp.eq.s32.totalorder %s31, 1
      %p253 = por %p251, %p252
      %p254 = scmp.ne.s32.totalorder %s245, %s246
      %p255 = scmp.eq.s32.totalorder %s31, 0
      %p256 = por %p254, %p255
      %p257 = scmp.ne.s32.totalorder %s245, %s246
      %p258 = scmp.eq.s32.totalorder %s32, 1
      %p259 = por %p257, %p258
      %p261 = scmp.ne.s32.totalorder %s246, %s260
      %p262 = scmp.eq.s32.totalorder %s32, 0
      %p263 = por %p261, %p262
      %s265 = sadd.s32 %s264, 1
      %p268 = scmp.eq.s32.totalorder %s26, 1
      %p269 = scmp.ne.s32.totalorder %s264, %s266
      %p270 = scmp.eq.s32.totalorder %s26, 0
      %p271 = por %p269, %p270
      %p272 = scmp.ne.s32.totalorder %s264, %s266
      %p273 = scmp.eq.s32.totalorder %s31, 1
      %p274 = por %p272, %p273
      %p275 = scmp.ne.s32.totalorder %s266, %s267
      %p276 = scmp.eq.s32.totalorder %s31, 0
      %p277 = por %p275, %p276
      %p278 = scmp.ne.s32.totalorder %s266, %s267
      %p279 = scmp.eq.s32.totalorder %s32, 1
      %p280 = por %p278, %p279
      %p282 = scmp.ne.s32.totalorder %s267, %s281
      %p283 = scmp.eq.s32.totalorder %s32, 0
      %p284 = por %p282, %p283
      %s286 = sadd.s32 %s285, 1
      %p289 = scmp.eq.s32.totalorder %s26, 1
      %p290 = scmp.ne.s32.totalorder %s285, %s287
      %p291 = scmp.eq.s32.totalorder %s26, 0
      %p292 = por %p290, %p291
      %p293 = scmp.ne.s32.totalorder %s285, %s287
      %p294 = scmp.eq.s32.totalorder %s31, 1
      %p295 = por %p293, %p294
      %p296 = scmp.ne.s32.totalorder %s287, %s288
      %p297 = scmp.eq.s32.totalorder %s31, 0
      %p298 = por %p296, %p297
      %p299 = scmp.ne.s32.totalorder %s287, %s288
      %p300 = scmp.eq.s32.totalorder %s32, 1
      %p301 = por %p299, %p300
      %p303 = scmp.ne.s32.totalorder %s288, %s302
      %p304 = scmp.eq.s32.totalorder %s32, 0
      %p305 = por %p303, %p304
      %s306 = ssub.s32 %s26, %s33
      %p307 = scmp.eq.s32.totalorder %s306, 0
      %s309 = sadd.s32 %s308, 1
      %s310 = scalar_select %p307, %s308, %s309
      %p313 = pneg %p307
      %p314 = scmp.eq.s32.totalorder %s26, 1
      %p315 = por %p313, %p314
      %p316 = scmp.ne.s32.totalorder %s308, %s311
      %p317 = scmp.eq.s32.totalorder %s26, 0
      %p318 = por %p316, %p317
      %p319 = scmp.ne.s32.totalorder %s308, %s311
      %p320 = scmp.eq.s32.totalorder %s31, 1
      %p321 = por %p319, %p320
      %p322 = scmp.ne.s32.totalorder %s311, %s312
      %p323 = scmp.eq.s32.totalorder %s31, 0
      %p324 = por %p322, %p323
      %p325 = scmp.ne.s32.totalorder %s311, %s312
      %p326 = scmp.eq.s32.totalorder %s32, 1
      %p327 = por %p325, %p326
      %p329 = scmp.ne.s32.totalorder %s312, %s328
      %p330 = scmp.eq.s32.totalorder %s32, 0
      %p331 = por %p329, %p330
      %s332 = ssub.s32 %s26, %s33
      %p333 = scmp.eq.s32.totalorder %s332, 0
      %s335 = sadd.s32 %s334, 1
      %s336 = scalar_select %p333, %s334, %s335
      %p339 = pneg %p333
      %p340 = scmp.eq.s32.totalorder %s26, 1
      %p341 = por %p339, %p340
      %p342 = scmp.ne.s32.totalorder %s334, %s337
      %p343 = scmp.eq.s32.totalorder %s26, 0
      %p344 = por %p342, %p343
      %p345 = scmp.ne.s32.totalorder %s334, %s337
      %p346 = scmp.eq.s32.totalorder %s31, 1
      %p347 = por %p345, %p346
      %p348 = scmp.ne.s32.totalorder %s337, %s338
      %p349 = scmp.eq.s32.totalorder %s31, 0
      %p350 = por %p348, %p349
      %p351 = scmp.ne.s32.totalorder %s337, %s338
      %p352 = scmp.eq.s32.totalorder %s32, 1
      %p353 = por %p351, %p352
      %p355 = scmp.ne.s32.totalorder %s338, %s354
      %p356 = scmp.eq.s32.totalorder %s32, 0
      %p357 = por %p355, %p356
      %p358 = scmp.le.s32.totalorder 1, %s26
      %p359 = scmp.lt.s32.totalorder %s26, 3
      %p360 = pnand %p358, %p359
      %p361 = pneg %p360
      // Predicated region
      $region9: #{tpu_custom_call.1} parent=5 // pred_check
        _
      $region10: #{tpu_custom_call.1} parent=5 // pred_check_branch
        %363 = sbr.rel (%p360) target = $region12
      $region11: #{tpu_custom_call.1} parent=5 // pred_region
        %s364 = ssub.s32 %s26, 1
        // Predicated region
        $region13: #{tpu_custom_call.1} parent=11 // pred_check
          %p365 = pneg %p151
        $region14: #{tpu_custom_call.1} parent=11 // pred_check_branch
          %367 = sbr.rel (%p365) target = $region16
        $region15: #{tpu_custom_call.1} parent=11 // pred_region
          _
        $region16: #{tpu_custom_call.1} parent=11 // pred_fallthru
          _
        // Predicated region
        $region17: #{tpu_custom_call.1} parent=11 // pred_check
          %p368 = pneg %p172
        $region18: #{tpu_custom_call.1} parent=11 // pred_check_branch
          %370 = sbr.rel (%p368) target = $region20
        $region19: #{tpu_custom_call.1} parent=11 // pred_region
          _
        $region20: #{tpu_custom_call.1} parent=11 // pred_fallthru
          _
        // Predicated region
        $region21: #{tpu_custom_call.1} parent=11 // pred_check
          %p371 = pneg %p193
        $region22: #{tpu_custom_call.1} parent=11 // pred_check_branch
          %373 = sbr.rel (%p371) target = $region24
        $region23: #{tpu_custom_call.1} parent=11 // pred_region
          _
        $region24: #{tpu_custom_call.1} parent=11 // pred_fallthru
          _
        // Predicated region
        $region25: #{tpu_custom_call.1} parent=11 // pred_check
          %p374 = pneg %p214
        $region26: #{tpu_custom_call.1} parent=11 // pred_check_branch
          %376 = sbr.rel (%p374) target = $region28
        $region27: #{tpu_custom_call.1} parent=11 // pred_region
          _
        $region28: #{tpu_custom_call.1} parent=11 // pred_fallthru
          _
        // Predicated region
        $region29: #{tpu_custom_call.1} parent=11 // pred_check
          %p377 = pneg %p235
        $region30: #{tpu_custom_call.1} parent=11 // pred_check_branch
          %379 = sbr.rel (%p377) target = $region32
        $region31: #{tpu_custom_call.1} parent=11 // pred_region
          _
        $region32: #{tpu_custom_call.1} parent=11 // pred_fallthru
          _
        // Predicated region
        $region33: #{tpu_custom_call.1} parent=11 // pred_check
          %p380 = pneg %p256
        $region34: #{tpu_custom_call.1} parent=11 // pred_check_branch
          %382 = sbr.rel (%p380) target = $region36
        $region35: #{tpu_custom_call.1} parent=11 // pred_region
          _
        $region36: #{tpu_custom_call.1} parent=11 // pred_fallthru
          _
        // Predicated region
        $region37: #{tpu_custom_call.1} parent=11 // pred_check
          %p383 = pneg %p277
        $region38: #{tpu_custom_call.1} parent=11 // pred_check_branch
          %385 = sbr.rel (%p383) target = $region40
        $region39: #{tpu_custom_call.1} parent=11 // pred_region
          _
        $region40: #{tpu_custom_call.1} parent=11 // pred_fallthru
          _
        // Predicated region
        $region41: #{tpu_custom_call.1} parent=11 // pred_check
          %p386 = pneg %p298
        $region42: #{tpu_custom_call.1} parent=11 // pred_check_branch
          %388 = sbr.rel (%p386) target = $region44
        $region43: #{tpu_custom_call.1} parent=11 // pred_region
          _
        $region44: #{tpu_custom_call.1} parent=11 // pred_fallthru
          _
      $region12: #{tpu_custom_call.1} parent=5 // pred_fallthru
        _
      %p389 = scmp.lt.s32.totalorder %s26, 2
      // Predicated region
      $region45: #{tpu_custom_call.1} parent=5 // pred_check
        %p390 = pneg %p389
      $region46: #{tpu_custom_call.1} parent=5 // pred_check_branch
        %392 = sbr.rel (%p390) target = $region48
      $region47: #{tpu_custom_call.1} parent=5 // pred_region
        // Predicated region
        $region49: #{tpu_custom_call.1} parent=47 // pred_check
          %p393 = pneg %p46
        $region50: #{tpu_custom_call.1} parent=47 // pred_check_branch
          %395 = sbr.rel (%p393) target = $region52
        $region51: #{tpu_custom_call.1} parent=47 // pred_region
          %p396 = scmp.lt.s32.totalorder %s26, 1
          %s397 = scalar_select %p396, %s26, 1
          %s398 = smul.addr %s397, 8
          %s399 = scalar_lea.vmem %s0, %s398
        $region52: #{tpu_custom_call.1} parent=47 // pred_fallthru
          _
        // Predicated region
        $region53: #{tpu_custom_call.1} parent=47 // pred_check
          %p400 = pneg %p72
        $region54: #{tpu_custom_call.1} parent=47 // pred_check_branch
          %402 = sbr.rel (%p400) target = $region56
        $region55: #{tpu_custom_call.1} parent=47 // pred_region
          %p403 = scmp.lt.s32.totalorder %s26, 1
          %s404 = scalar_select %p403, %s26, 1
          %s405 = smul.addr %s404, 8
          %s406 = scalar_lea.vmem %s1, %s405
        $region56: #{tpu_custom_call.1} parent=47 // pred_fallthru
          _
        // Predicated region
        $region57: #{tpu_custom_call.1} parent=47 // pred_check
          %p407 = pneg %p98
        $region58: #{tpu_custom_call.1} parent=47 // pred_check_branch
          %409 = sbr.rel (%p407) target = $region60
        $region59: #{tpu_custom_call.1} parent=47 // pred_region
          %p410 = scmp.lt.s32.totalorder %s26, 1
          %s411 = scalar_select %p410, %s26, 1
          %s412 = smul.addr %s411, 8
          %s413 = scalar_lea.vmem %s2, %s412
        $region60: #{tpu_custom_call.1} parent=47 // pred_fallthru
          _
        // Predicated region
        $region61: #{tpu_custom_call.1} parent=47 // pred_check
          %p414 = pneg %p124
        $region62: #{tpu_custom_call.1} parent=47 // pred_check_branch
          %416 = sbr.rel (%p414) target = $region64
        $region63: #{tpu_custom_call.1} parent=47 // pred_region
          %p417 = scmp.lt.s32.totalorder %s26, 1
          %s418 = scalar_select %p417, %s26, 1
          %s419 = smul.addr %s418, 2
          %s420 = scalar_lea.vmem %s3, %s419
        $region64: #{tpu_custom_call.1} parent=47 // pred_fallthru
          _
      $region48: #{tpu_custom_call.1} parent=5 // pred_fallthru
        _
      %p421 = scmp.le.s32.totalorder 1, %s26
      %p422 = scmp.lt.s32.totalorder %s26, 3
      %p423 = pnand %p421, %p422
      %p424 = pneg %p423
      // Predicated region
      $region65: #{tpu_custom_call.1} parent=5 // pred_check
        _
      $region66: #{tpu_custom_call.1} parent=5 // pred_check_branch
        %426 = sbr.rel (%p423) target = $region68
      $region67: #{tpu_custom_call.1} parent=5 // pred_region
        %s427 = ssub.s32 %s26, 1
        %p428 = scmp.lt.s32.totalorder %s31, 1
        %s429 = scalar_select %p428, %s31, 1
        %s430 = smul.addr %s429, 8
        %s431 = scalar_lea.vmem %s0, %s430
        %p432 = pneg %p52
        %p433 = pneg %p49
        %p434 = scmp.lt.s32.totalorder %s31, 1
        %s435 = scalar_select %p434, %s31, 1
        %s436 = smul.addr %s435, 8
        %s437 = scalar_lea.vmem %s1, %s436
        %p438 = pneg %p78
        %p439 = pneg %p75
        %p440 = scmp.lt.s32.totalorder %s31, 1
        %s441 = scalar_select %p440, %s31, 1
        %s442 = smul.addr %s441, 8
        %s443 = scalar_lea.vmem %s2, %s442
        %p444 = pneg %p104
        %p445 = pneg %p101
        %p446 = scmp.lt.s32.totalorder %s31, 1
        %s447 = scalar_select %p446, %s31, 1
        %s448 = smul.addr %s447, 2
        %s449 = scalar_lea.vmem %s3, %s448
        %p450 = pneg %p130
        %p451 = pneg %p127
        %p452 = pneg %p151
        %p453 = pneg %p148
        %p454 = pneg %p172
        %p455 = pneg %p169
        %p456 = pneg %p193
        %p457 = pneg %p190
        %p458 = pneg %p214
        %p459 = pneg %p211
        %p460 = pneg %p235
        %p461 = pneg %p232
        %p462 = pneg %p256
        %p463 = pneg %p253
        %p464 = pneg %p277
        %p465 = pneg %p274
        %p466 = pneg %p298
        %p467 = pneg %p295
        %p468 = pneg %p324
        %p469 = pneg %p321
        %s470 = sand.u32 %s311, 1
        %s471 = scalar_lea.sflag [#allocation3], %s470
        %s472 = sand.u32 %s311, 1
        %s473 = smul.addr %s472, 8
        %s474 = scalar_lea.vmem [#allocation2], %s473
        %p475 = pneg %p350
        %p476 = pneg %p347
        %s477 = sand.u32 %s337, 1
        %s478 = scalar_lea.sflag [#allocation5], %s477
        %s479 = sand.u32 %s337, 1
        %s480 = smul.addr %s479, 8
        %s481 = scalar_lea.vmem [#allocation4], %s480
        %p482 = scmp.lt.s32.totalorder %s31, 1
        %s483 = scalar_select %p482, %s31, 1
        %s484 = smul.addr %s483, 8
        %s485 = scalar_lea.vmem %s0, %s484
        %p486 = scmp.lt.s32.totalorder %s31, 1
        %s487 = scalar_select %p486, %s31, 1
        %s488 = smul.addr %s487, 8
        %s489 = scalar_lea.vmem %s1, %s488
        %p490 = scmp.lt.s32.totalorder %s31, 1
        %s491 = scalar_select %p490, %s31, 1
        %s492 = smul.addr %s491, 8
        %s493 = scalar_lea.vmem %s2, %s492
        %p494 = scmp.lt.s32.totalorder %s31, 1
        %s495 = scalar_select %p494, %s31, 1
        %s496 = smul.addr %s495, 2
        %s497 = scalar_lea.vmem %s3, %s496
        %v499 = vld [vmem:[%s485] sm:$0xff]
        %v500 = vpack.c.bf16 %v499, %v499
        %v501 = vld [vmem:[%s489] sm:$0xff]
        %v502 = vpack.c.bf16 %v501, %v501
        %v503 = vld [vmem:[%s493] sm:$0xff]
        %v504 = vpack.c.bf16 %v503, %v503
        %v505 = vld [vmem:[%s4] sm:$0xf]
        %v506 = vld [vmem:[%s4 + $0x4] sm:$0xf]
        %v507 = vld [vmem:[%s4 + $0x8] sm:$0xf]
        %v508 = vld [vmem:[%s4 + $0xc] sm:$0xf]
        %v509 = vld [vmem:[%s4 + $0x10] sm:$0xf]
        %v510 = vld [vmem:[%s4 + $0x14] sm:$0xf]
        %v511 = vld [vmem:[%s4 + $0x18] sm:$0xf]
        %v512 = vld [vmem:[%s4 + $0x1c] sm:$0xf]
        %v513 = vld [vmem:[%s4 + $0x20] sm:$0xf]
        %v514 = vld [vmem:[%s4 + $0x24] sm:$0xf]
        %v515 = vld [vmem:[%s4 + $0x28] sm:$0xf]
        %v516 = vld [vmem:[%s4 + $0x2c] sm:$0xf]
        %v517 = vld [vmem:[%s4 + $0x30] sm:$0xf]
        %v518 = vld [vmem:[%s4 + $0x34] sm:$0xf]
        %v519 = vld [vmem:[%s4 + $0x38] sm:$0xf]
        %v520 = vld [vmem:[%s4 + $0x3c] sm:$0xf]
        %v521 = vld [vmem:[%s5] sm:$0x1]
        %v522 = vld [vmem:[%s5 + $0x1] sm:$0x1]
        %v523 = vld [vmem:[%s5 + $0x2] sm:$0x1]
        %v524 = vld [vmem:[%s5 + $0x3] sm:$0x1]
        %v529 = vperm.slane %v521, 0
        %v530 = vperm.slane %v522, 0
        %v531 = vperm.slane %v523, 0
        %v532 = vperm.slane %v524, 0
        %v541 = vunpack.c.l.b16 %v505
        %v542 = vunpack.c.l.b16 %v506
        %v543 = vunpack.c.l.b16 %v507
        %v544 = vunpack.c.l.b16 %v508
        %v545 = vpack.c.b16 %v542, %v541
        %v546 = vpack.c.b16 %v544, %v543
        %vm549 = vcmask 261120
        %v551 = vsel %vm549, %v500, 0
        %553 = vmatpush.bf16.msra.mxu0 0
        %554 = vmatpush.bf16.msra.mxu0 0
        %555 = vmatpush.bf16.msra.mxu0 0
        %556 = vmatpush.bf16.msra.mxu0 0
        %557 = vmatpush.bf16.msra.mxu0 0
        %558 = vmatpush.bf16.msra.mxu0 0
        %559 = vmatpush.bf16.msra.mxu0 %v546
        %560 = vmatpush.bf16.msra.mxu0 %v545
        %561 = vmatmul.bf16.gmra.mxu0 %v551
        %v562 = vpop.f32.mrf.mxu0
        %v563 = vadd.f32 %v529, %v562
        %v564 = vpop.f32.mrf.mxu0
        %565 = vdwg.mxu0
        %v570 = vunpack.c.l.b16 %v509
        %v571 = vunpack.c.l.b16 %v510
        %v572 = vunpack.c.l.b16 %v511
        %v573 = vunpack.c.l.b16 %v512
        %v574 = vpack.c.b16 %v571, %v570
        %v575 = vpack.c.b16 %v573, %v572
        %578 = vmatpush.bf16.msra.mxu0 0
        %579 = vmatpush.bf16.msra.mxu0 0
        %580 = vmatpush.bf16.msra.mxu0 0
        %581 = vmatpush.bf16.msra.mxu0 0
        %582 = vmatpush.bf16.msra.mxu0 0
        %583 = vmatpush.bf16.msra.mxu0 0
        %584 = vmatpush.bf16.msra.mxu0 %v575
        %585 = vmatpush.bf16.msra.mxu0 %v574
        %586 = vmatmul.bf16.gmra.mxu0 %v551
        %v587 = vpop.f32.mrf.mxu0
        %v588 = vadd.f32 %v530, %v587
        %v589 = vpop.f32.mrf.mxu0
        %590 = vdwg.mxu0
        %v595 = vunpack.c.l.b16 %v513
        %v596 = vunpack.c.l.b16 %v514
        %v597 = vunpack.c.l.b16 %v515
        %v598 = vunpack.c.l.b16 %v516
        %v599 = vpack.c.b16 %v596, %v595
        %v600 = vpack.c.b16 %v598, %v597
        %603 = vmatpush.bf16.msra.mxu0 0
        %604 = vmatpush.bf16.msra.mxu0 0
        %605 = vmatpush.bf16.msra.mxu0 0
        %606 = vmatpush.bf16.msra.mxu0 0
        %607 = vmatpush.bf16.msra.mxu0 0
        %608 = vmatpush.bf16.msra.mxu0 0
        %609 = vmatpush.bf16.msra.mxu0 %v600
        %610 = vmatpush.bf16.msra.mxu0 %v599
        %611 = vmatmul.bf16.gmra.mxu0 %v551
        %v612 = vpop.f32.mrf.mxu0
        %v613 = vadd.f32 %v531, %v612
        %v614 = vpop.f32.mrf.mxu0
        %615 = vdwg.mxu0
        %v620 = vunpack.c.l.b16 %v517
        %v621 = vunpack.c.l.b16 %v518
        %v622 = vunpack.c.l.b16 %v519
        %v623 = vunpack.c.l.b16 %v520
        %v624 = vpack.c.b16 %v621, %v620
        %v625 = vpack.c.b16 %v623, %v622
        %628 = vmatpush.bf16.msra.mxu0 0
        %629 = vmatpush.bf16.msra.mxu0 0
        %630 = vmatpush.bf16.msra.mxu0 0
        %631 = vmatpush.bf16.msra.mxu0 0
        %632 = vmatpush.bf16.msra.mxu0 0
        %633 = vmatpush.bf16.msra.mxu0 0
        %634 = vmatpush.bf16.msra.mxu0 %v625
        %635 = vmatpush.bf16.msra.mxu0 %v624
        %636 = vmatmul.bf16.gmra.mxu0 %v551
        %v637 = vpop.f32.mrf.mxu0
        %v638 = vadd.f32 %v532, %v637
        %v639 = vpop.f32.mrf.mxu0
        %640 = vdwg.mxu0
        %v641 = vld [vmem:[%s6] sm:$0xf]
        %v642 = vld [vmem:[%s6 + $0x4] sm:$0xf]
        %v643 = vld [vmem:[%s6 + $0x8] sm:$0xf]
        %v644 = vld [vmem:[%s6 + $0xc] sm:$0xf]
        %v645 = vld [vmem:[%s6 + $0x10] sm:$0xf]
        %v646 = vld [vmem:[%s6 + $0x14] sm:$0xf]
        %v647 = vld [vmem:[%s6 + $0x18] sm:$0xf]
        %v648 = vld [vmem:[%s6 + $0x1c] sm:$0xf]
        %v649 = vld [vmem:[%s6 + $0x20] sm:$0xf]
        %v650 = vld [vmem:[%s6 + $0x24] sm:$0xf]
        %v651 = vld [vmem:[%s6 + $0x28] sm:$0xf]
        %v652 = vld [vmem:[%s6 + $0x2c] sm:$0xf]
        %v653 = vld [vmem:[%s6 + $0x30] sm:$0xf]
        %v654 = vld [vmem:[%s6 + $0x34] sm:$0xf]
        %v655 = vld [vmem:[%s6 + $0x38] sm:$0xf]
        %v656 = vld [vmem:[%s6 + $0x3c] sm:$0xf]
        %v657 = vld [vmem:[%s7] sm:$0x1]
        %v658 = vld [vmem:[%s7 + $0x1] sm:$0x1]
        %v659 = vld [vmem:[%s7 + $0x2] sm:$0x1]
        %v660 = vld [vmem:[%s7 + $0x3] sm:$0x1]
        %v665 = vperm.slane %v657, 0
        %v666 = vperm.slane %v658, 0
        %v667 = vperm.slane %v659, 0
        %v668 = vperm.slane %v660, 0
        %v677 = vunpack.c.l.b16 %v641
        %v678 = vunpack.c.l.b16 %v642
        %v679 = vunpack.c.l.b16 %v643
        %v680 = vunpack.c.l.b16 %v644
        %v681 = vpack.c.b16 %v678, %v677
        %v682 = vpack.c.b16 %v680, %v679
        %v686 = vsel %vm549, %v502, 0
        %688 = vmatpush.bf16.msra.mxu0 0
        %689 = vmatpush.bf16.msra.mxu0 0
        %690 = vmatpush.bf16.msra.mxu0 0
        %691 = vmatpush.bf16.msra.mxu0 0
        %692 = vmatpush.bf16.msra.mxu0 0
        %693 = vmatpush.bf16.msra.mxu0 0
        %694 = vmatpush.bf16.msra.mxu0 %v682
        %695 = vmatpush.bf16.msra.mxu0 %v681
        %696 = vmatmul.bf16.gmra.mxu0 %v686
        %v697 = vpop.f32.mrf.mxu0
        %v698 = vadd.f32 %v665, %v697
        %v699 = vpop.f32.mrf.mxu0
        %700 = vdwg.mxu0
        %v705 = vunpack.c.l.b16 %v645
        %v706 = vunpack.c.l.b16 %v646
        %v707 = vunpack.c.l.b16 %v647
        %v708 = vunpack.c.l.b16 %v648
        %v709 = vpack.c.b16 %v706, %v705
        %v710 = vpack.c.b16 %v708, %v707
        %713 = vmatpush.bf16.msra.mxu0 0
        %714 = vmatpush.bf16.msra.mxu0 0
        %715 = vmatpush.bf16.msra.mxu0 0
        %716 = vmatpush.bf16.msra.mxu0 0
        %717 = vmatpush.bf16.msra.mxu0 0
        %718 = vmatpush.bf16.msra.mxu0 0
        %719 = vmatpush.bf16.msra.mxu0 %v710
        %720 = vmatpush.bf16.msra.mxu0 %v709
        %721 = vmatmul.bf16.gmra.mxu0 %v686
        %v722 = vpop.f32.mrf.mxu0
        %v723 = vadd.f32 %v666, %v722
        %v724 = vpop.f32.mrf.mxu0
        %725 = vdwg.mxu0
        %v730 = vunpack.c.l.b16 %v649
        %v731 = vunpack.c.l.b16 %v650
        %v732 = vunpack.c.l.b16 %v651
        %v733 = vunpack.c.l.b16 %v652
        %v734 = vpack.c.b16 %v731, %v730
        %v735 = vpack.c.b16 %v733, %v732
        %738 = vmatpush.bf16.msra.mxu0 0
        %739 = vmatpush.bf16.msra.mxu0 0
        %740 = vmatpush.bf16.msra.mxu0 0
        %741 = vmatpush.bf16.msra.mxu0 0
        %742 = vmatpush.bf16.msra.mxu0 0
        %743 = vmatpush.bf16.msra.mxu0 0
        %744 = vmatpush.bf16.msra.mxu0 %v735
        %745 = vmatpush.bf16.msra.mxu0 %v734
        %746 = vmatmul.bf16.gmra.mxu0 %v686
        %v747 = vpop.f32.mrf.mxu0
        %v748 = vadd.f32 %v667, %v747
        %v749 = vpop.f32.mrf.mxu0
        %750 = vdwg.mxu0
        %v755 = vunpack.c.l.b16 %v653
        %v756 = vunpack.c.l.b16 %v654
        %v757 = vunpack.c.l.b16 %v655
        %v758 = vunpack.c.l.b16 %v656
        %v759 = vpack.c.b16 %v756, %v755
        %v760 = vpack.c.b16 %v758, %v757
        %763 = vmatpush.bf16.msra.mxu0 0
        %764 = vmatpush.bf16.msra.mxu0 0
        %765 = vmatpush.bf16.msra.mxu0 0
        %766 = vmatpush.bf16.msra.mxu0 0
        %767 = vmatpush.bf16.msra.mxu0 0
        %768 = vmatpush.bf16.msra.mxu0 0
        %769 = vmatpush.bf16.msra.mxu0 %v760
        %770 = vmatpush.bf16.msra.mxu0 %v759
        %771 = vmatmul.bf16.gmra.mxu0 %v686
        %v772 = vpop.f32.mrf.mxu0
        %v773 = vadd.f32 %v668, %v772
        %v774 = vpop.f32.mrf.mxu0
        %775 = vdwg.mxu0
        %v776 = vld [vmem:[%s8] sm:$0xf]
        %v777 = vld [vmem:[%s8 + $0x4] sm:$0xf]
        %v778 = vld [vmem:[%s8 + $0x8] sm:$0xf]
        %v779 = vld [vmem:[%s8 + $0xc] sm:$0xf]
        %v780 = vld [vmem:[%s8 + $0x10] sm:$0xf]
        %v781 = vld [vmem:[%s8 + $0x14] sm:$0xf]
        %v782 = vld [vmem:[%s8 + $0x18] sm:$0xf]
        %v783 = vld [vmem:[%s8 + $0x1c] sm:$0xf]
        %v784 = vld [vmem:[%s8 + $0x20] sm:$0xf]
        %v785 = vld [vmem:[%s8 + $0x24] sm:$0xf]
        %v786 = vld [vmem:[%s8 + $0x28] sm:$0xf]
        %v787 = vld [vmem:[%s8 + $0x2c] sm:$0xf]
        %v788 = vld [vmem:[%s8 + $0x30] sm:$0xf]
        %v789 = vld [vmem:[%s8 + $0x34] sm:$0xf]
        %v790 = vld [vmem:[%s8 + $0x38] sm:$0xf]
        %v791 = vld [vmem:[%s8 + $0x3c] sm:$0xf]
        %v792 = vld [vmem:[%s9] sm:$0x1]
        %v793 = vld [vmem:[%s9 + $0x1] sm:$0x1]
        %v794 = vld [vmem:[%s9 + $0x2] sm:$0x1]
        %v795 = vld [vmem:[%s9 + $0x3] sm:$0x1]
        %v800 = vperm.slane %v792, 0
        %v801 = vperm.slane %v793, 0
        %v802 = vperm.slane %v794, 0
        %v803 = vperm.slane %v795, 0
        %v812 = vunpack.c.l.b16 %v776
        %v813 = vunpack.c.l.b16 %v777
        %v814 = vunpack.c.l.b16 %v778
        %v815 = vunpack.c.l.b16 %v779
        %v816 = vpack.c.b16 %v813, %v812
        %v817 = vpack.c.b16 %v815, %v814
        %v821 = vsel %vm549, %v504, 0
        %823 = vmatpush.bf16.msra.mxu0 0
        %824 = vmatpush.bf16.msra.mxu0 0
        %825 = vmatpush.bf16.msra.mxu0 0
        %826 = vmatpush.bf16.msra.mxu0 0
        %827 = vmatpush.bf16.msra.mxu0 0
        %828 = vmatpush.bf16.msra.mxu0 0
        %829 = vmatpush.bf16.msra.mxu0 %v817
        %830 = vmatpush.bf16.msra.mxu0 %v816
        %831 = vmatmul.bf16.gmra.mxu0 %v821
        %v832 = vpop.f32.mrf.mxu0
        %v833 = vadd.f32 %v800, %v832
        %v834 = vpop.f32.mrf.mxu0
        %835 = vdwg.mxu0
        %v840 = vunpack.c.l.b16 %v780
        %v841 = vunpack.c.l.b16 %v781
        %v842 = vunpack.c.l.b16 %v782
        %v843 = vunpack.c.l.b16 %v783
        %v844 = vpack.c.b16 %v841, %v840
        %v845 = vpack.c.b16 %v843, %v842
        %848 = vmatpush.bf16.msra.mxu0 0
        %849 = vmatpush.bf16.msra.mxu0 0
        %850 = vmatpush.bf16.msra.mxu0 0
        %851 = vmatpush.bf16.msra.mxu0 0
        %852 = vmatpush.bf16.msra.mxu0 0
        %853 = vmatpush.bf16.msra.mxu0 0
        %854 = vmatpush.bf16.msra.mxu0 %v845
        %855 = vmatpush.bf16.msra.mxu0 %v844
        %856 = vmatmul.bf16.gmra.mxu0 %v821
        %v857 = vpop.f32.mrf.mxu0
        %v858 = vadd.f32 %v801, %v857
        %v859 = vpop.f32.mrf.mxu0
        %860 = vdwg.mxu0
        %v865 = vunpack.c.l.b16 %v784
        %v866 = vunpack.c.l.b16 %v785
        %v867 = vunpack.c.l.b16 %v786
        %v868 = vunpack.c.l.b16 %v787
        %v869 = vpack.c.b16 %v866, %v865
        %v870 = vpack.c.b16 %v868, %v867
        %873 = vmatpush.bf16.msra.mxu0 0
        %874 = vmatpush.bf16.msra.mxu0 0
        %875 = vmatpush.bf16.msra.mxu0 0
        %876 = vmatpush.bf16.msra.mxu0 0
        %877 = vmatpush.bf16.msra.mxu0 0
        %878 = vmatpush.bf16.msra.mxu0 0
        %879 = vmatpush.bf16.msra.mxu0 %v870
        %880 = vmatpush.bf16.msra.mxu0 %v869
        %881 = vmatmul.bf16.gmra.mxu0 %v821
        %v882 = vpop.f32.mrf.mxu0
        %v883 = vadd.f32 %v802, %v882
        %v884 = vpop.f32.mrf.mxu0
        %885 = vdwg.mxu0
        %v890 = vunpack.c.l.b16 %v788
        %v891 = vunpack.c.l.b16 %v789
        %v892 = vunpack.c.l.b16 %v790
        %v893 = vunpack.c.l.b16 %v791
        %v894 = vpack.c.b16 %v891, %v890
        %v895 = vpack.c.b16 %v893, %v892
        %898 = vmatpush.bf16.msra.mxu0 0
        %899 = vmatpush.bf16.msra.mxu0 0
        %900 = vmatpush.bf16.msra.mxu0 0
        %901 = vmatpush.bf16.msra.mxu0 0
        %902 = vmatpush.bf16.msra.mxu0 0
        %903 = vmatpush.bf16.msra.mxu0 0
        %904 = vmatpush.bf16.msra.mxu0 %v895
        %905 = vmatpush.bf16.msra.mxu0 %v894
        %906 = vmatmul.bf16.gmra.mxu0 %v821
        %v907 = vpop.f32.mrf.mxu0
        %v908 = vadd.f32 %v803, %v907
        %v909 = vpop.f32.mrf.mxu0
        %910 = vdwg.mxu0
        %v911 = vmul.f32 %v563, 0.35355338
        %v912 = vmul.f32 %v588, 0.35355338
        %v913 = vmul.f32 %v613, 0.35355338
        %v914 = vmul.f32 %v638, 0.35355338
        %v915 = vpack.c.bf16 %v911, %v911
        %v916 = vpack.c.bf16 %v912, %v912
        %v917 = vpack.c.bf16 %v913, %v913
        %v918 = vpack.c.bf16 %v914, %v914
        %v919 = vpack.c.bf16 %v698, %v698
        %v920 = vpack.c.bf16 %v723, %v723
        %v921 = vpack.c.bf16 %v748, %v748
        %v922 = vpack.c.bf16 %v773, %v773
        %vm923 = vcmask 64512
        %v925 = vsel %vm923, %v915, 0
        %v928 = vsel %vm923, %v919, 0
        %930 = vmatpush.bf16.xpose.msra.mxu0 0
        %931 = vmatpush.bf16.xpose.msra.mxu0 0
        %932 = vmatpush.bf16.xpose.msra.mxu0 0
        %933 = vmatpush.bf16.xpose.msra.mxu0 0
        %934 = vmatpush.bf16.xpose.msra.mxu0 0
        %935 = vmatpush.bf16.xpose.msra.mxu0 0
        %936 = vmatpush.bf16.xpose.msra.mxu0 0
        %937 = vmatpush.bf16.xpose.msra.mxu0 %v928
        %938 = vmatmul.bf16.gmra.mxu0 %v925
        %v939 = vpop.f32.mrf.mxu0
        %v940 = vadd.f32 0.0, %v939
        %v941 = vpop.f32.mrf.mxu0
        %942 = vdwg.mxu0
        %v944 = vsel %vm923, %v916, 0
        %v947 = vsel %vm923, %v920, 0
        %949 = vmatpush.bf16.xpose.msra.mxu0 0
        %950 = vmatpush.bf16.xpose.msra.mxu0 0
        %951 = vmatpush.bf16.xpose.msra.mxu0 0
        %952 = vmatpush.bf16.xpose.msra.mxu0 0
        %953 = vmatpush.bf16.xpose.msra.mxu0 0
        %954 = vmatpush.bf16.xpose.msra.mxu0 0
        %955 = vmatpush.bf16.xpose.msra.mxu0 0
        %956 = vmatpush.bf16.xpose.msra.mxu0 %v947
        %957 = vmatmul.bf16.gmra.mxu0 %v944
        %v958 = vpop.f32.mrf.mxu0
        %v959 = vadd.f32 0.0, %v958
        %v960 = vpop.f32.mrf.mxu0
        %961 = vdwg.mxu0
        %v963 = vsel %vm923, %v917, 0
        %v966 = vsel %vm923, %v921, 0
        %968 = vmatpush.bf16.xpose.msra.mxu0 0
        %969 = vmatpush.bf16.xpose.msra.mxu0 0
        %970 = vmatpush.bf16.xpose.msra.mxu0 0
        %971 = vmatpush.bf16.xpose.msra.mxu0 0
        %972 = vmatpush.bf16.xpose.msra.mxu0 0
        %973 = vmatpush.bf16.xpose.msra.mxu0 0
        %974 = vmatpush.bf16.xpose.msra.mxu0 0
        %975 = vmatpush.bf16.xpose.msra.mxu0 %v966
        %976 = vmatmul.bf16.gmra.mxu0 %v963
        %v977 = vpop.f32.mrf.mxu0
        %v978 = vadd.f32 0.0, %v977
        %v979 = vpop.f32.mrf.mxu0
        %980 = vdwg.mxu0
        %v982 = vsel %vm923, %v918, 0
        %v985 = vsel %vm923, %v922, 0
        %987 = vmatpush.bf16.xpose.msra.mxu0 0
        %988 = vmatpush.bf16.xpose.msra.mxu0 0
        %989 = vmatpush.bf16.xpose.msra.mxu0 0
        %990 = vmatpush.bf16.xpose.msra.mxu0 0
        %991 = vmatpush.bf16.xpose.msra.mxu0 0
        %992 = vmatpush.bf16.xpose.msra.mxu0 0
        %993 = vmatpush.bf16.xpose.msra.mxu0 0
        %994 = vmatpush.bf16.xpose.msra.mxu0 %v985
        %995 = vmatmul.bf16.gmra.mxu0 %v982
        %v996 = vpop.f32.mrf.mxu0
        %v997 = vadd.f32 0.0, %v996
        %v998 = vpop.f32.mrf.mxu0
        %999 = vdwg.mxu0
        %v1000 = vld [vmem:[%s497] sm:$0x3]
        %v1001 = vunpack.c.0.s8 %v1000
        %vm1002 = vcmp.ne.s32.totalorder %v1001, 0
        %v1003 = vsel %vm1002, %v940, -1e+30
        %v1004 = vsel %vm1002, %v959, -1e+30
        %v1005 = vsel %vm1002, %v978, -1e+30
        %v1006 = vsel %vm1002, %v997, -1e+30
        %v1007 = vsel %vm923, %v1003, -inf
        %1008 = vmax.xlane.f32.xlu0 %v1007
        %v1009 = vpop.xlane.xlu0 %1008
        %v1010 = vsel %vm923, %v1004, -inf
        %1011 = vmax.xlane.f32.xlu0 %v1010
        %v1012 = vpop.xlane.xlu0 %1011
        %v1013 = vsel %vm923, %v1005, -inf
        %1014 = vmax.xlane.f32.xlu0 %v1013
        %v1015 = vpop.xlane.xlu0 %1014
        %v1016 = vsel %vm923, %v1006, -inf
        %1017 = vmax.xlane.f32.xlu0 %v1016
        %v1018 = vpop.xlane.xlu0 %1017
        %v1019 = vsub.f32 %v1003, %v1009
        %v1020 = vsub.f32 %v1004, %v1012
        %v1021 = vsub.f32 %v1005, %v1015
        %v1022 = vsub.f32 %v1006, %v1018
        %v1023 = vmul.f32 %v1019, 1.442695
        %v1024 = vpow.pop %v1023
        %v1025 = vmul.f32 %v1020, 1.442695
        %v1026 = vpow.pop %v1025
        %v1027 = vmul.f32 %v1021, 1.442695
        %v1028 = vpow.pop %v1027
        %v1029 = vmul.f32 %v1022, 1.442695
        %v1030 = vpow.pop %v1029
        %v1031 = vsel %vm923, %v1024, 0.0
        %1032 = vadd.xlane.f32.xlu0 %v1031
        %v1033 = vpop.xlane.xlu0 %1032
        %v1034 = vsel %vm923, %v1026, 0.0
        %1035 = vadd.xlane.f32.xlu0 %v1034
        %v1036 = vpop.xlane.xlu0 %1035
        %v1037 = vsel %vm923, %v1028, 0.0
        %1038 = vadd.xlane.f32.xlu0 %v1037
        %v1039 = vpop.xlane.xlu0 %1038
        %v1040 = vsel %vm923, %v1030, 0.0
        %1041 = vadd.xlane.f32.xlu0 %v1040
        %v1042 = vpop.xlane.xlu0 %1041
        %v1043 = vrcp.pop %v1033
        %v1044 = vrcp.pop %v1036
        %v1045 = vrcp.pop %v1039
        %v1046 = vrcp.pop %v1042
        %v1047 = vmul.f32 %v1024, %v1043
        %v1048 = vmul.f32 %v1026, %v1044
        %v1049 = vmul.f32 %v1028, %v1045
        %v1050 = vmul.f32 %v1030, %v1046
        %v1051 = vsel %vm923, %v1047, 0.0
        %v1052 = vsel %vm923, %v1048, 0.0
        %v1053 = vadd.f32 %v1051, %v1052
        %v1054 = vsel %vm923, %v1049, 0.0
        %v1055 = vadd.f32 %v1053, %v1054
        %v1056 = vsel %vm923, %v1050, 0.0
        %v1057 = vadd.f32 %v1055, %v1056
        %1058 = vst.msk [vmem:[%s481] sm:$0xff] %vm923, %v1057
        %v1059 = vpack.c.bf16 %v1047, %v1047
        %v1060 = vpack.c.bf16 %v1048, %v1048
        %v1061 = vpack.c.bf16 %v1049, %v1049
        %v1062 = vpack.c.bf16 %v1050, %v1050
        %v1063 = vpack.c.bf16 %v833, %v833
        %v1064 = vpack.c.bf16 %v858, %v858
        %v1065 = vpack.c.bf16 %v883, %v883
        %v1066 = vpack.c.bf16 %v908, %v908
        %v1068 = vsel %vm923, %v1059, 0
        %vm1070 = vcmask 1043456
        %v1072 = vsel %vm1070, %v1063, 0
        %1074 = vmatpush.bf16.msra.mxu0 0
        %1075 = vmatpush.bf16.msra.mxu0 0
        %1076 = vmatpush.bf16.msra.mxu0 0
        %1077 = vmatpush.bf16.msra.mxu0 0
        %1078 = vmatpush.bf16.msra.mxu0 0
        %1079 = vmatpush.bf16.msra.mxu0 0
        %1080 = vmatpush.bf16.msra.mxu0 0
        %1081 = vmatpush.bf16.msra.mxu0 %v1072
        %1082 = vmatmul.bf16.gmra.mxu0 %v1068
        %v1083 = vpop.f32.mrf.mxu0
        %v1084 = vadd.f32 0.0, %v1083
        %v1085 = vpop.f32.mrf.mxu0
        %1086 = vdwg.mxu0
        %v1088 = vsel %vm923, %v1060, 0
        %v1091 = vsel %vm1070, %v1064, 0
        %1093 = vmatpush.bf16.msra.mxu0 0
        %1094 = vmatpush.bf16.msra.mxu0 0
        %1095 = vmatpush.bf16.msra.mxu0 0
        %1096 = vmatpush.bf16.msra.mxu0 0
        %1097 = vmatpush.bf16.msra.mxu0 0
        %1098 = vmatpush.bf16.msra.mxu0 0
        %1099 = vmatpush.bf16.msra.mxu0 0
        %1100 = vmatpush.bf16.msra.mxu0 %v1091
        %1101 = vmatmul.bf16.gmra.mxu0 %v1088
        %v1102 = vpop.f32.mrf.mxu0
        %v1103 = vadd.f32 0.0, %v1102
        %v1104 = vpop.f32.mrf.mxu0
        %1105 = vdwg.mxu0
        %v1107 = vsel %vm923, %v1061, 0
        %v1110 = vsel %vm1070, %v1065, 0
        %1112 = vmatpush.bf16.msra.mxu0 0
        %1113 = vmatpush.bf16.msra.mxu0 0
        %1114 = vmatpush.bf16.msra.mxu0 0
        %1115 = vmatpush.bf16.msra.mxu0 0
        %1116 = vmatpush.bf16.msra.mxu0 0
        %1117 = vmatpush.bf16.msra.mxu0 0
        %1118 = vmatpush.bf16.msra.mxu0 0
        %1119 = vmatpush.bf16.msra.mxu0 %v1110
        %1120 = vmatmul.bf16.gmra.mxu0 %v1107
        %v1121 = vpop.f32.mrf.mxu0
        %v1122 = vadd.f32 0.0, %v1121
        %v1123 = vpop.f32.mrf.mxu0
        %1124 = vdwg.mxu0
        %v1126 = vsel %vm923, %v1062, 0
        %v1129 = vsel %vm1070, %v1066, 0
        %1131 = vmatpush.bf16.msra.mxu0 0
        %1132 = vmatpush.bf16.msra.mxu0 0
        %1133 = vmatpush.bf16.msra.mxu0 0
        %1134 = vmatpush.bf16.msra.mxu0 0
        %1135 = vmatpush.bf16.msra.mxu0 0
        %1136 = vmatpush.bf16.msra.mxu0 0
        %1137 = vmatpush.bf16.msra.mxu0 0
        %1138 = vmatpush.bf16.msra.mxu0 %v1129
        %1139 = vmatmul.bf16.gmra.mxu0 %v1126
        %v1140 = vpop.f32.mrf.mxu0
        %v1141 = vadd.f32 0.0, %v1140
        %v1142 = vpop.f32.mrf.mxu0
        %1143 = vdwg.mxu0
        %v1144 = vpack.c.bf16 %v1084, %v1084
        %v1145 = vpack.c.bf16 %v1103, %v1103
        %v1146 = vpack.c.bf16 %v1122, %v1122
        %v1147 = vpack.c.bf16 %v1141, %v1141
        %v1148 = vld [vmem:[%s10] sm:$0xf]
        %v1149 = vld [vmem:[%s10 + $0x4] sm:$0xf]
        %v1150 = vld [vmem:[%s10 + $0x8] sm:$0xf]
        %v1151 = vld [vmem:[%s10 + $0xc] sm:$0xf]
        %v1153 = vsel %vm923, %v1144, 0
        %v1156 = vsel %vm1070, %v1148, 0
        %1158 = vmatpush.bf16.msra.mxu0 0
        %1159 = vmatpush.bf16.msra.mxu0 0
        %1160 = vmatpush.bf16.msra.mxu0 0
        %1161 = vmatpush.bf16.msra.mxu0 0
        %1162 = vmatpush.bf16.msra.mxu0 0
        %1163 = vmatpush.bf16.msra.mxu0 0
        %1164 = vmatpush.bf16.msra.mxu0 0
        %1165 = vmatpush.bf16.msra.mxu0 %v1156
        %1166 = vmatmul.bf16.gmra.mxu0 %v1153
        %v1167 = vpop.f32.mrf.mxu0
        %v1168 = vadd.f32 0.0, %v1167
        %v1169 = vpop.f32.mrf.mxu0
        %1170 = vdwg.mxu0
        %v1172 = vsel %vm923, %v1145, 0
        %v1175 = vsel %vm1070, %v1149, 0
        %1177 = vmatpush.bf16.msra.mxu0 0
        %1178 = vmatpush.bf16.msra.mxu0 0
        %1179 = vmatpush.bf16.msra.mxu0 0
        %1180 = vmatpush.bf16.msra.mxu0 0
        %1181 = vmatpush.bf16.msra.mxu0 0
        %1182 = vmatpush.bf16.msra.mxu0 0
        %1183 = vmatpush.bf16.msra.mxu0 0
        %1184 = vmatpush.bf16.msra.mxu0 %v1175
        %1185 = vmatmul.bf16.gmra.mxu0 %v1172
        %v1186 = vpop.f32.mrf.mxu0
        %v1187 = vadd.f32 0.0, %v1186
        %v1188 = vpop.f32.mrf.mxu0
        %1189 = vdwg.mxu0
        %v1191 = vsel %vm923, %v1146, 0
        %v1194 = vsel %vm1070, %v1150, 0
        %1196 = vmatpush.bf16.msra.mxu0 0
        %1197 = vmatpush.bf16.msra.mxu0 0
        %1198 = vmatpush.bf16.msra.mxu0 0
        %1199 = vmatpush.bf16.msra.mxu0 0
        %1200 = vmatpush.bf16.msra.mxu0 0
        %1201 = vmatpush.bf16.msra.mxu0 0
        %1202 = vmatpush.bf16.msra.mxu0 0
        %1203 = vmatpush.bf16.msra.mxu0 %v1194
        %1204 = vmatmul.bf16.gmra.mxu0 %v1191
        %v1205 = vpop.f32.mrf.mxu0
        %v1206 = vadd.f32 0.0, %v1205
        %v1207 = vpop.f32.mrf.mxu0
        %1208 = vdwg.mxu0
        %v1210 = vsel %vm923, %v1147, 0
        %v1213 = vsel %vm1070, %v1151, 0
        %1215 = vmatpush.bf16.msra.mxu0 0
        %1216 = vmatpush.bf16.msra.mxu0 0
        %1217 = vmatpush.bf16.msra.mxu0 0
        %1218 = vmatpush.bf16.msra.mxu0 0
        %1219 = vmatpush.bf16.msra.mxu0 0
        %1220 = vmatpush.bf16.msra.mxu0 0
        %1221 = vmatpush.bf16.msra.mxu0 0
        %1222 = vmatpush.bf16.msra.mxu0 %v1213
        %1223 = vmatmul.bf16.gmra.mxu0 %v1210
        %v1224 = vpop.f32.mrf.mxu0
        %v1225 = vadd.f32 0.0, %v1224
        %v1226 = vpop.f32.mrf.mxu0
        %1227 = vdwg.mxu0
        %v1228 = vsel %vm549, %v1168, 0.0
        %v1229 = vsel %vm549, %v1187, 0.0
        %v1230 = vadd.f32 %v1228, %v1229
        %v1231 = vsel %vm549, %v1206, 0.0
        %v1232 = vadd.f32 %v1230, %v1231
        %v1233 = vsel %vm549, %v1225, 0.0
        %v1234 = vadd.f32 %v1232, %v1233
        %v1235 = vld [vmem:[%s11] sm:$0x1]
        %v1237 = vperm.slane %v1235, 0
        %v1239 = vadd.f32 %v1234, %v1237
        %1240 = vst.msk [vmem:[%s474] sm:$0xff] %vm549, %v1239
        %s1241 = sand.u32 %s311, 1
        %s1242 = scalar_lea.sflag [#allocation3], %s1241
        %s1243 = sand.u32 %s311, 1
        %s1244 = smul.addr %s1243, 8
        %s1245 = scalar_lea.vmem [#allocation2], %s1244
        %s1246 = sand.u32 %s337, 1
        %s1247 = scalar_lea.sflag [#allocation5], %s1246
        %s1248 = sand.u32 %s337, 1
        %s1249 = smul.addr %s1248, 8
        %s1250 = scalar_lea.vmem [#allocation4], %s1249
        // Predicated region
        $region69: #{tpu_custom_call.1} parent=67 // pred_check
          %p1251 = pneg %p321
        $region70: #{tpu_custom_call.1} parent=67 // pred_check_branch
          %1253 = sbr.rel (%p1251) target = $region72
        $region71: #{tpu_custom_call.1} parent=67 // pred_region
          %1255 = vsyncadd %s1242, 0
          %s1256 = smul.addr %s31, 8
          %s1257 = scalar_lea.hbm %s12, %s1256
          %s1259 = sshll.u32 %s1245, 4
          %s1260 = int_to_ptr.vmem [resolvable:$true] %s1259
          %s1261 = sshll.u32 %s1257, 4
          %s1262 = int_to_ptr.hbm [resolvable:$true] %s1261
          %1264 = dma.vmem_to_hbm [thread:$0]  %s1260, 128, %s1262, %s1242
        $region72: #{tpu_custom_call.1} parent=67 // pred_fallthru
          _
        // Predicated region
        $region73: #{tpu_custom_call.1} parent=67 // pred_check
          %p1265 = pneg %p347
        $region74: #{tpu_custom_call.1} parent=67 // pred_check_branch
          %1267 = sbr.rel (%p1265) target = $region76
        $region75: #{tpu_custom_call.1} parent=67 // pred_region
          %1269 = vsyncadd %s1247, 0
          %s1270 = smul.addr %s31, 8
          %s1271 = scalar_lea.hbm %s13, %s1270
          %s1273 = sshll.u32 %s1250, 4
          %s1274 = int_to_ptr.vmem [resolvable:$true] %s1273
          %s1275 = sshll.u32 %s1271, 4
          %s1276 = int_to_ptr.hbm [resolvable:$true] %s1275
          %1278 = dma.vmem_to_hbm [thread:$0]  %s1274, 128, %s1276, %s1247
        $region76: #{tpu_custom_call.1} parent=67 // pred_fallthru
          _
      $region68: #{tpu_custom_call.1} parent=5 // pred_fallthru
        _
      %p1279 = scmp.le.s32.totalorder 2, %s26
      // Predicated region
      $region77: #{tpu_custom_call.1} parent=5 // pred_check
        %p1280 = pneg %p1279
      $region78: #{tpu_custom_call.1} parent=5 // pred_check_branch
        %1282 = sbr.rel (%p1280) target = $region80
      $region79: #{tpu_custom_call.1} parent=5 // pred_region
        %s1283 = ssub.s32 %s26, 2
        // Predicated region
        $region81: #{tpu_custom_call.1} parent=79 // pred_check
          %p1284 = pneg %p327
        $region82: #{tpu_custom_call.1} parent=79 // pred_check_branch
          %1286 = sbr.rel (%p1284) target = $region84
        $region83: #{tpu_custom_call.1} parent=79 // pred_region
          %s1287 = sand.u32 %s312, 1
          %s1288 = scalar_lea.sflag [#allocation3], %s1287
          %s1289 = sand.u32 %s312, 1
          %s1290 = smul.addr %s1289, 8
          %s1291 = scalar_lea.vmem [#allocation2], %s1290
          %1293 = dma.done %s1288, 128
        $region84: #{tpu_custom_call.1} parent=79 // pred_fallthru
          _
        // Predicated region
        $region85: #{tpu_custom_call.1} parent=79 // pred_check
          %p1294 = pneg %p353
        $region86: #{tpu_custom_call.1} parent=79 // pred_check_branch
          %1296 = sbr.rel (%p1294) target = $region88
        $region87: #{tpu_custom_call.1} parent=79 // pred_region
          %s1297 = sand.u32 %s338, 1
          %s1298 = scalar_lea.sflag [#allocation5], %s1297
          %s1299 = sand.u32 %s338, 1
          %s1300 = smul.addr %s1299, 8
          %s1301 = scalar_lea.vmem [#allocation4], %s1300
          %1303 = dma.done %s1298, 128
        $region88: #{tpu_custom_call.1} parent=79 // pred_fallthru
          _
      $region80: #{tpu_custom_call.1} parent=5 // pred_fallthru
        _
    $region6: #{tpu_custom_call.1} parent=1 // loop_footer
      %s30 = sadd.s32 1, %s26
    $region7: #{tpu_custom_call.1} parent=1 // loop_footer_branch
      %25 = sbr.rel target = $region3
    $region8: #{tpu_custom_call.1} parent=1 // loop_exit
      _
    %1304 = vsyncpa [#allocation3], 1
    %s1305 = scalar_lea.sflag [#allocation3], 1
    %1306 = vsyncpa %s1305, 1
    %1307 = vsyncpa [#allocation5], 1
    %s1308 = scalar_lea.sflag [#allocation5], 1
    %1309 = vsyncpa %s1308, 1

</llo_original>
